<compile_context>
chip_gen: v7x
topology: tpu7x:2x2x1
jax: 0.10.0
libtpu: 0.0.40
codegen_flags: <defaults>
</compile_context>

<pallas_src>
import functools

import jax
import jax.numpy as jnp
import numpy as np
from jax.experimental import pallas as pl
from jax.experimental.pallas import tpu as pltpu


# ---------------------------------------------------------------------------
# Kernel
# ---------------------------------------------------------------------------
def _layernorm(x, g, b, eps=1e-5):
    mu = jnp.mean(x, axis=-1, keepdims=True)
    var = jnp.mean((x - mu) ** 2, axis=-1, keepdims=True)
    return (x - mu) * jax.lax.rsqrt(var + eps) * g + b


def _transformer_kernel(x_ref, ln1g, ln1b, wqkv, bqkv, wo_h, bo,
                        ln2g, ln2b, w1, b1, w2, b2,
                        o_ref, x_sc, *, heads):
    """One grid step = one ResidualAttentionBlock applied to one batch element.

    grid = (B, L).  The activation is carried across the layer axis in VMEM
    scratch `x_sc` (f32); per-layer weights are streamed as bf16 blocks.

    Ref shapes (per grid step):
      x_ref : (1, S, W) f32        wqkv : (1, W, 3W) bf16
      wo_h  : (1, H, hd, W) bf16   w1   : (1, W, 4W) bf16   w2 : (1, 4W, W) bf16
      LN params / biases : (1, 1, dim) f32
    """
    layer = pl.program_id(1)

    @pl.when(layer == 0)
    def _():
        x_sc[...] = x_ref[0].astype(jnp.float32)

    x = x_sc[...]                                     # (S, W) f32
    S, W = x.shape
    hd = W // heads
    bf16 = jnp.bfloat16
    f32 = jnp.float32

    # ---- attention branch: x + out_proj(MHA(ln_1(x))) ----
    h = _layernorm(x, ln1g[0, 0, :], ln1b[0, 0, :])
    qkv = jnp.dot(h.astype(bf16), wqkv[0], preferred_element_type=f32) + bqkv[0, 0, :]

    scale = 1.0 / float(hd) ** 0.5
    q = qkv[:, 0 * W:1 * W] * scale
    k = qkv[:, 1 * W:2 * W]
    v = qkv[:, 2 * W:3 * W]
    # Head-batched (H, S, hd) layout: stack along a new major axis (cheap).
    qh = jnp.stack([q[:, i * hd:(i + 1) * hd] for i in range(heads)], axis=0)
    kh = jnp.stack([k[:, i * hd:(i + 1) * hd] for i in range(heads)], axis=0)
    vh = jnp.stack([v[:, i * hd:(i + 1) * hd] for i in range(heads)], axis=0)

    s = jnp.einsum('hqd,hkd->hqk', qh.astype(bf16), kh.astype(bf16),
                   preferred_element_type=f32)                      # (H, S, S) f32
    s = s - jnp.max(s, axis=-1, keepdims=True)
    e = jnp.exp(s)
    p = e * pl.reciprocal(jnp.sum(e, axis=-1, keepdims=True), approx=True)
    oh = jnp.einsum('hqk,hkd->hqd', p.astype(bf16), vh.astype(bf16),
                    preferred_element_type=f32)                     # (H, S, hd)
    # Output projection folded per head (avoids lane-dim concatenate).
    proj = jnp.einsum('hqd,hdw->hqw', oh.astype(bf16), wo_h[0],
                      preferred_element_type=f32)                   # (H, S, W)
    attn = jnp.sum(proj, axis=0) + bo[0, 0, :]
    x1 = x + attn

    # ---- MLP branch: x1 + l2(QuickGELU(l1(ln_2(x1)))) ----
    h2 = _layernorm(x1, ln2g[0, 0, :], ln2b[0, 0, :])
    u = jnp.dot(h2.astype(bf16), w1[0], preferred_element_type=f32) + b1[0, 0, :]
    u = u * jax.nn.sigmoid(1.702 * u)                               # QuickGELU (f32)
    m = jnp.dot(u.astype(bf16), w2[0], preferred_element_type=f32) + b2[0, 0, :]
    x2 = x1 + m

    x_sc[...] = x2

    @pl.when(layer == pl.num_programs(1) - 1)
    def _():
        o_ref[0] = x2.astype(o_ref.dtype)


# ---------------------------------------------------------------------------
# Wrapper: the whole layer stack in ONE pallas_call
# ---------------------------------------------------------------------------
def transformer_forward(x_sbw, layer_params, heads):
    """x_sbw: (S, B, W) f32 in PyTorch [seq, batch, width] layout."""
    S, B, W = x_sbw.shape
    L = len(layer_params)
    hd = W // heads
    bf16 = jnp.bfloat16
    f32 = jnp.float32

    def stack(fn, dtype):
        return jnp.stack([fn(p) for p in layer_params], axis=0).astype(dtype)

    # bf16 matmul weights (pre-transposed); f32 biases / LN params.
    wqkv_t = stack(lambda p: p["in_proj_w"].T, bf16)                         # (L, W, 3W)
    wo_h = stack(lambda p: p["out_proj_w"].T.reshape(heads, hd, W), bf16)    # (L, H, hd, W)
    w1_t = stack(lambda p: p["l1_w"].T, bf16)                                # (L, W, 4W)
    w2_t = stack(lambda p: p["l2_w"].T, bf16)                                # (L, 4W, W)
    ln1g = stack(lambda p: p["ln1_g"].reshape(1, W), f32)                    # (L, 1, W)
    ln1b = stack(lambda p: p["ln1_b"].reshape(1, W), f32)
    bqkv = stack(lambda p: p["in_proj_b"].reshape(1, 3 * W), f32)
    bo = stack(lambda p: p["out_proj_b"].reshape(1, W), f32)
    ln2g = stack(lambda p: p["ln2_g"].reshape(1, W), f32)
    ln2b = stack(lambda p: p["ln2_b"].reshape(1, W), f32)
    b1 = stack(lambda p: p["l1_b"].reshape(1, 4 * W), f32)
    b2 = stack(lambda p: p["l2_b"].reshape(1, W), f32)

    args = (ln1g, ln1b, wqkv_t, bqkv, wo_h, bo, ln2g, ln2b, w1_t, b1, w2_t, b2)

    def layer_spec(a):
        nd = a.ndim
        return pl.BlockSpec((1,) + a.shape[1:],
                            lambda b, l, nd=nd: (l,) + (0,) * (nd - 1))

    in_specs = [pl.BlockSpec((1, S, W), lambda b, l: (b, 0, 0))]
    in_specs += [layer_spec(a) for a in args]

    # Single transpose in / out of (B, S, W) layout for the whole stack.
    x_bsw = jnp.transpose(x_sbw, (1, 0, 2))

    # Advisory cost estimate.
    flops = int(B * L * (24 * S * W * W + 4 * S * S * W))
    transc = int(B * L * (heads * S * S + 4 * S * W))
    bytes_acc = int(2 * B * S * W * 4 + L * 12 * W * W * 2 + L * 16 * W * 4)

    # VMEM budget: double-buffered bf16 weights + activation blocks + intermediates.
    wt = 2 * 2 * (12 * W * W)                       # 2 buffers x bf16 x (3+1+4+4)*W^2
    io = 2 * 2 * S * W * 4 + S * W * 4              # x/out blocks + f32 carry scratch
    interm = 4 * (S * 3 * W + 3 * S * W + 2 * heads * S * S + heads * S * W + 5 * 4 * S * W)
    vmem_limit = min(max(int(1.5 * (wt + io + interm)), 32 * 1024 * 1024),
                     64 * 1024 * 1024)

    kernel = functools.partial(_transformer_kernel, heads=heads)
    out_bsw = pl.pallas_call(
        kernel,
        out_shape=jax.ShapeDtypeStruct((B, S, W), x_sbw.dtype),
        grid_spec=pltpu.PrefetchScalarGridSpec(
            num_scalar_prefetch=0,
            grid=(B, L),
            in_specs=in_specs,
            out_specs=pl.BlockSpec((1, S, W), lambda b, l: (b, 0, 0)),
            scratch_shapes=[pltpu.VMEM((S, W), jnp.float32)],
        ),
        compiler_params=pltpu.CompilerParams(
            dimension_semantics=("parallel", "arbitrary"),
            vmem_limit_bytes=vmem_limit,
        ),
        cost_estimate=pl.CostEstimate(
            flops=flops, transcendentals=transc, bytes_accessed=bytes_acc),
    )(x_bsw, *args)
    return jnp.transpose(out_bsw, (1, 0, 2))        # back to (S, B, W)


# ---------------------------------------------------------------------------
# Pure-JAX f32 reference (for correctness check)
# ---------------------------------------------------------------------------
def _reference_block(x, p, heads):
    S, B, W = x.shape
    hd = W // heads
    h = _layernorm(x, p["ln1_g"], p["ln1_b"])
    qkv = jnp.einsum("sbw,ow->sbo", h, p["in_proj_w"]) + p["in_proj_b"]
    q, k, v = qkv[..., :W], qkv[..., W:2 * W], qkv[..., 2 * W:]
    q = q.reshape(S, B, heads, hd) / (hd ** 0.5)
    k = k.reshape(S, B, heads, hd)
    v = v.reshape(S, B, heads, hd)
    s = jnp.einsum("sbhd,tbhd->bhst", q, k)
    pgt = jax.nn.softmax(s, axis=-1)
    o = jnp.einsum("bhst,tbhd->sbhd", pgt, v).reshape(S, B, W)
    attn = jnp.einsum("sbw,ow->sbo", o, p["out_proj_w"]) + p["out_proj_b"]
    x1 = x + attn
    h2 = _layernorm(x1, p["ln2_g"], p["ln2_b"])
    u = jnp.einsum("sbw,ow->sbo", h2, p["l1_w"]) + p["l1_b"]
    u = u * jax.nn.sigmoid(1.702 * u)
    m = jnp.einsum("sbo,wo->sbw", u, p["l2_w"]) + p["l2_b"]
    return x1 + m


def reference_forward(x, layer_params, heads):
    for p in layer_params:
        x = _reference_block(x, p, heads)
    return x


# ---------------------------------------------------------------------------
# Deterministic parameter init (PyTorch-shaped)
# ---------------------------------------------------------------------------
def init_layer_params(key, width, layers):
    params = []
    for i in range(layers):
        ks = jax.random.split(jax.random.fold_in(key, i), 8)
        s = 0.05
        params.append({
            "ln1_g": jnp.ones((width,), jnp.float32),
            "ln1_b": jnp.zeros((width,), jnp.float32),
            "in_proj_w": s * jax.random.normal(ks[0], (3 * width, width), jnp.float32),
            "in_proj_b": s * jax.random.normal(ks[1], (3 * width,), jnp.float32),
            "out_proj_w": s * jax.random.normal(ks[2], (width, width), jnp.float32),
            "out_proj_b": s * jax.random.normal(ks[3], (width,), jnp.float32),
            "ln2_g": jnp.ones((width,), jnp.float32),
            "ln2_b": jnp.zeros((width,), jnp.float32),
            "l1_w": s * jax.random.normal(ks[4], (4 * width, width), jnp.float32),
            "l1_b": s * jax.random.normal(ks[5], (4 * width,), jnp.float32),
            "l2_w": s * jax.random.normal(ks[6], (width, 4 * width), jnp.float32),
            "l2_b": s * jax.random.normal(ks[7], (width,), jnp.float32),
        })
    return params


# ---------------------------------------------------------------------------
if __name__ == "__main__":
    S, B = 16, 2          # seq, batch
    WIDTH, LAYERS, HEADS = 128, 2, 4   # W multiple of 128 -> lane-dense stores

    key = jax.random.PRNGKey(0)
    kx, kp = jax.random.split(key)
    x = jax.random.normal(kx, (S, B, WIDTH), jnp.float32)   # layout: [S, B, W]
    layer_params = init_layer_params(kp, WIDTH, LAYERS)

    out = transformer_forward(x, layer_params, HEADS)
    out = jax.block_until_ready(out)

    ref = jax.block_until_ready(reference_forward(x, layer_params, HEADS))
    # bf16 matmul operands (f32 accumulation) => relaxed tolerance vs f32 reference.
    np.testing.assert_allclose(np.asarray(out), np.asarray(ref), atol=3e-2, rtol=3e-2)

    print("KERNEL_OK")
</pallas_src>

<mosaic_0001>
module attributes {stable_mosaic.version = 11 : i64} {
  func.func @_transformer_kernel(%arg0: i32, %arg1: i32, %arg2: memref<1x16x128xf32, #tpu.memory_space<vmem>>, %arg3: memref<1x1x128xf32, #tpu.memory_space<vmem>>, %arg4: memref<1x1x128xf32, #tpu.memory_space<vmem>>, %arg5: memref<1x128x384xbf16, #tpu.memory_space<vmem>>, %arg6: memref<1x1x384xf32, #tpu.memory_space<vmem>>, %arg7: memref<1x4x32x128xbf16, #tpu.memory_space<vmem>>, %arg8: memref<1x1x128xf32, #tpu.memory_space<vmem>>, %arg9: memref<1x1x128xf32, #tpu.memory_space<vmem>>, %arg10: memref<1x1x128xf32, #tpu.memory_space<vmem>>, %arg11: memref<1x128x512xbf16, #tpu.memory_space<vmem>>, %arg12: memref<1x1x512xf32, #tpu.memory_space<vmem>>, %arg13: memref<1x512x128xbf16, #tpu.memory_space<vmem>>, %arg14: memref<1x1x128xf32, #tpu.memory_space<vmem>>, %arg15: memref<1x16x128xf32, #tpu.memory_space<vmem>>, %arg16: memref<16x128xf32, #tpu.memory_space<vmem>>) attributes {dimension_semantics = [#tpu.dimension_semantics<parallel>, #tpu.dimension_semantics<arbitrary>], iteration_bounds = array<i64: 2, 2>, scalar_prefetch = 0 : i64, scratch_operands = 1 : i64, tpu.core_type = #tpu.core_type<tc>, window_params = [{transform_indices = @transform_0, window_bounds = array<i64: 1, 16, 128>}, {transform_indices = @transform_1, window_bounds = array<i64: 1, 1, 128>}, {transform_indices = @transform_2, window_bounds = array<i64: 1, 1, 128>}, {transform_indices = @transform_3, window_bounds = array<i64: 1, 128, 384>}, {transform_indices = @transform_4, window_bounds = array<i64: 1, 1, 384>}, {transform_indices = @transform_5, window_bounds = array<i64: 1, 4, 32, 128>}, {transform_indices = @transform_6, window_bounds = array<i64: 1, 1, 128>}, {transform_indices = @transform_7, window_bounds = array<i64: 1, 1, 128>}, {transform_indices = @transform_8, window_bounds = array<i64: 1, 1, 128>}, {transform_indices = @transform_9, window_bounds = array<i64: 1, 128, 512>}, {transform_indices = @transform_10, window_bounds = array<i64: 1, 1, 512>}, {transform_indices = @transform_11, window_bounds = array<i64: 1, 512, 128>}, {transform_indices = @transform_12, window_bounds = array<i64: 1, 1, 128>}, {transform_indices = @transform_13, window_bounds = array<i64: 1, 16, 128>}]} {
    %c0_i32 = arith.constant 0 : i32
    %0 = arith.cmpi eq, %arg1, %c0_i32 : i32
    %1 = arith.extui %0 : i1 to i32
    %c0_i32_0 = arith.constant 0 : i32
    %2 = arith.cmpi ne, %1, %c0_i32_0 : i32
    scf.if %2 {
      %c0_63 = arith.constant 0 : index
      %c0_64 = arith.constant 0 : index
      %c0_65 = arith.constant 0 : index
      %159 = vector.load %arg2[%c0_63, %c0_64, %c0_65] : memref<1x16x128xf32, #tpu.memory_space<vmem>>, vector<1x16x128xf32>
      %160 = vector.shape_cast %159 : vector<1x16x128xf32> to vector<16x128xf32>
      %c0_66 = arith.constant 0 : index
      %c0_67 = arith.constant 0 : index
      %161 = vector.load %arg16[%c0_66, %c0_67] : memref<16x128xf32, #tpu.memory_space<vmem>>, vector<16x128xf32>
      tpu.vector_store %arg16[%c0_66, %c0_67], %160 {strides = array<i32>} : memref<16x128xf32, #tpu.memory_space<vmem>>, vector<16x128xf32>,
    } else {
    }
    %c0 = arith.constant 0 : index
    %c0_1 = arith.constant 0 : index
    %3 = vector.load %arg16[%c0, %c0_1] : memref<16x128xf32, #tpu.memory_space<vmem>>, vector<16x128xf32>
    %c0_2 = arith.constant 0 : index
    %c0_3 = arith.constant 0 : index
    %c0_4 = arith.constant 0 : index
    %4 = vector.load %arg3[%c0_2, %c0_3, %c0_4] : memref<1x1x128xf32, #tpu.memory_space<vmem>>, vector<1x1x128xf32>
    %5 = vector.shape_cast %4 : vector<1x1x128xf32> to vector<128xf32>
    %c0_5 = arith.constant 0 : index
    %c0_6 = arith.constant 0 : index
    %c0_7 = arith.constant 0 : index
    %6 = vector.load %arg4[%c0_5, %c0_6, %c0_7] : memref<1x1x128xf32, #tpu.memory_space<vmem>>, vector<1x1x128xf32>
    %7 = vector.shape_cast %6 : vector<1x1x128xf32> to vector<128xf32>
    %cst = arith.constant dense<0.000000e+00> : vector<16xf32>
    %8 = vector.multi_reduction <add>, %3, %cst [1] : vector<16x128xf32> to vector<16xf32>
    %9 = vector.shape_cast %8 : vector<16xf32> to vector<16x1xf32>
    %cst_8 = arith.constant 1.280000e+02 : f32
    %10 = vector.broadcast %cst_8 : f32 to vector<16x1xf32>
    %11 = arith.divf %9, %10 : vector<16x1xf32>
    %12 = vector.broadcast %11 : vector<16x1xf32> to vector<16x128xf32>
    %13 = arith.subf %3, %12 : vector<16x128xf32>
    %14 = arith.mulf %13, %13 : vector<16x128xf32>
    %cst_9 = arith.constant dense<0.000000e+00> : vector<16xf32>
    %15 = vector.multi_reduction <add>, %14, %cst_9 [1] : vector<16x128xf32> to vector<16xf32>
    %16 = vector.shape_cast %15 : vector<16xf32> to vector<16x1xf32>
    %cst_10 = arith.constant 1.280000e+02 : f32
    %17 = vector.broadcast %cst_10 : f32 to vector<16x1xf32>
    %18 = arith.divf %16, %17 : vector<16x1xf32>
    %19 = vector.broadcast %11 : vector<16x1xf32> to vector<16x128xf32>
    %20 = arith.subf %3, %19 : vector<16x128xf32>
    %cst_11 = arith.constant 9.99999974E-6 : f32
    %21 = vector.broadcast %cst_11 : f32 to vector<16x1xf32>
    %22 = arith.addf %18, %21 : vector<16x1xf32>
    %23 = math.rsqrt %22 : vector<16x1xf32>
    %24 = vector.broadcast %23 : vector<16x1xf32> to vector<16x128xf32>
    %25 = arith.mulf %20, %24 : vector<16x128xf32>
    %26 = vector.shape_cast %5 : vector<128xf32> to vector<1x128xf32>
    %27 = vector.broadcast %26 : vector<1x128xf32> to vector<16x128xf32>
    %28 = arith.mulf %25, %27 : vector<16x128xf32>
    %29 = vector.shape_cast %7 : vector<128xf32> to vector<1x128xf32>
    %30 = vector.broadcast %29 : vector<1x128xf32> to vector<16x128xf32>
    %31 = arith.addf %28, %30 : vector<16x128xf32>
    %32 = arith.truncf %31 : vector<16x128xf32> to vector<16x128xbf16>
    %c0_12 = arith.constant 0 : index
    %c0_13 = arith.constant 0 : index
    %c0_14 = arith.constant 0 : index
    %33 = vector.load %arg5[%c0_12, %c0_13, %c0_14] : memref<1x128x384xbf16, #tpu.memory_space<vmem>>, vector<1x128x384xbf16>
    %34 = vector.shape_cast %33 : vector<1x128x384xbf16> to vector<128x384xbf16>
    %cst_15 = arith.constant dense<0.000000e+00> : vector<16x384xf32>
    %35 = tpu.matmul %32, %34, %cst_15 {dimension_numbers = #tpu.dot_dimension_numbers<[1], [0], [0], [1], [0, 0, 1, 1], [], []>} : vector<16x128xbf16>, vector<128x384xbf16>, vector<16x384xf32> -> vector<16x384xf32>
    %c0_16 = arith.constant 0 : index
    %c0_17 = arith.constant 0 : index
    %c0_18 = arith.constant 0 : index
    %36 = vector.load %arg6[%c0_16, %c0_17, %c0_18] : memref<1x1x384xf32, #tpu.memory_space<vmem>>, vector<1x1x384xf32>
    %37 = vector.shape_cast %36 : vector<1x1x384xf32> to vector<384xf32>
    %38 = vector.shape_cast %37 : vector<384xf32> to vector<1x384xf32>
    %39 = vector.broadcast %38 : vector<1x384xf32> to vector<16x384xf32>
    %40 = arith.addf %35, %39 : vector<16x384xf32>
    %41 = vector.extract_strided_slice %40 {offsets = [0, 0], sizes = [16, 128], strides = [1, 1]} : vector<16x384xf32> to vector<16x128xf32>
    %cst_19 = arith.constant 0.176776692 : f32
    %42 = vector.broadcast %cst_19 : f32 to vector<16x128xf32>
    %43 = arith.mulf %41, %42 : vector<16x128xf32>
    %44 = vector.extract_strided_slice %40 {offsets = [0, 128], sizes = [16, 128], strides = [1, 1]} : vector<16x384xf32> to vector<16x128xf32>
    %45 = vector.extract_strided_slice %40 {offsets = [0, 256], sizes = [16, 128], strides = [1, 1]} : vector<16x384xf32> to vector<16x128xf32>
    %46 = vector.extract_strided_slice %43 {offsets = [0, 0], sizes = [16, 32], strides = [1, 1]} : vector<16x128xf32> to vector<16x32xf32>
    %47 = vector.extract_strided_slice %43 {offsets = [0, 32], sizes = [16, 32], strides = [1, 1]} : vector<16x128xf32> to vector<16x32xf32>
    %48 = vector.extract_strided_slice %43 {offsets = [0, 64], sizes = [16, 32], strides = [1, 1]} : vector<16x128xf32> to vector<16x32xf32>
    %49 = vector.extract_strided_slice %43 {offsets = [0, 96], sizes = [16, 32], strides = [1, 1]} : vector<16x128xf32> to vector<16x32xf32>
    %50 = vector.shape_cast %46 : vector<16x32xf32> to vector<1x16x32xf32>
    %51 = vector.shape_cast %47 : vector<16x32xf32> to vector<1x16x32xf32>
    %52 = vector.shape_cast %48 : vector<16x32xf32> to vector<1x16x32xf32>
    %53 = vector.shape_cast %49 : vector<16x32xf32> to vector<1x16x32xf32>
    %54 = tpu.concatenate %50, %51, %52, %53 in 0 : vector<1x16x32xf32>, vector<1x16x32xf32>, vector<1x16x32xf32>, vector<1x16x32xf32> -> vector<4x16x32xf32>
    %55 = vector.extract_strided_slice %44 {offsets = [0, 0], sizes = [16, 32], strides = [1, 1]} : vector<16x128xf32> to vector<16x32xf32>
    %56 = vector.extract_strided_slice %44 {offsets = [0, 32], sizes = [16, 32], strides = [1, 1]} : vector<16x128xf32> to vector<16x32xf32>
    %57 = vector.extract_strided_slice %44 {offsets = [0, 64], sizes = [16, 32], strides = [1, 1]} : vector<16x128xf32> to vector<16x32xf32>
    %58 = vector.extract_strided_slice %44 {offsets = [0, 96], sizes = [16, 32], strides = [1, 1]} : vector<16x128xf32> to vector<16x32xf32>
    %59 = vector.shape_cast %55 : vector<16x32xf32> to vector<1x16x32xf32>
    %60 = vector.shape_cast %56 : vector<16x32xf32> to vector<1x16x32xf32>
    %61 = vector.shape_cast %57 : vector<16x32xf32> to vector<1x16x32xf32>
    %62 = vector.shape_cast %58 : vector<16x32xf32> to vector<1x16x32xf32>
    %63 = tpu.concatenate %59, %60, %61, %62 in 0 : vector<1x16x32xf32>, vector<1x16x32xf32>, vector<1x16x32xf32>, vector<1x16x32xf32> -> vector<4x16x32xf32>
    %64 = vector.extract_strided_slice %45 {offsets = [0, 0], sizes = [16, 32], strides = [1, 1]} : vector<16x128xf32> to vector<16x32xf32>
    %65 = vector.extract_strided_slice %45 {offsets = [0, 32], sizes = [16, 32], strides = [1, 1]} : vector<16x128xf32> to vector<16x32xf32>
    %66 = vector.extract_strided_slice %45 {offsets = [0, 64], sizes = [16, 32], strides = [1, 1]} : vector<16x128xf32> to vector<16x32xf32>
    %67 = vector.extract_strided_slice %45 {offsets = [0, 96], sizes = [16, 32], strides = [1, 1]} : vector<16x128xf32> to vector<16x32xf32>
    %68 = vector.shape_cast %64 : vector<16x32xf32> to vector<1x16x32xf32>
    %69 = vector.shape_cast %65 : vector<16x32xf32> to vector<1x16x32xf32>
    %70 = vector.shape_cast %66 : vector<16x32xf32> to vector<1x16x32xf32>
    %71 = vector.shape_cast %67 : vector<16x32xf32> to vector<1x16x32xf32>
    %72 = tpu.concatenate %68, %69, %70, %71 in 0 : vector<1x16x32xf32>, vector<1x16x32xf32>, vector<1x16x32xf32>, vector<1x16x32xf32> -> vector<4x16x32xf32>
    %73 = arith.truncf %54 : vector<4x16x32xf32> to vector<4x16x32xbf16>
    %74 = arith.truncf %63 : vector<4x16x32xf32> to vector<4x16x32xbf16>
    "tpu.trace_start"() <{level = 10 : i32, message = "hqd,hkd->hqk"}> : () -> ()
    %cst_20 = arith.constant dense<0.000000e+00> : vector<4x16x16xf32>
    %75 = tpu.matmul %73, %74, %cst_20 {dimension_numbers = #tpu.dot_dimension_numbers<[2], [2], [1], [1], [0, 0, 0, 1, 1, 1], [0], [0]>} : vector<4x16x32xbf16>, vector<4x16x32xbf16>, vector<4x16x16xf32> -> vector<4x16x16xf32>
    "tpu.trace_stop"() : () -> ()
    %cst_21 = arith.constant dense<0xFF800000> : vector<4x16xf32>
    %76 = vector.multi_reduction <maximumf>, %75, %cst_21 [2] : vector<4x16x16xf32> to vector<4x16xf32>
    %77 = vector.shape_cast %76 : vector<4x16xf32> to vector<4x16x1xf32>
    %78 = vector.broadcast %77 : vector<4x16x1xf32> to vector<4x16x16xf32>
    %79 = arith.subf %75, %78 : vector<4x16x16xf32>
    %80 = math.exp %79 : vector<4x16x16xf32>
    %cst_22 = arith.constant dense<0.000000e+00> : vector<4x16xf32>
    %81 = vector.multi_reduction <add>, %80, %cst_22 [2] : vector<4x16x16xf32> to vector<4x16xf32>
    %82 = vector.shape_cast %81 : vector<4x16xf32> to vector<4x16x1xf32>
    %83 = tpu.reciprocal %82 {approx = true} : vector<4x16x1xf32> -> vector<4x16x1xf32>
    %84 = vector.broadcast %83 : vector<4x16x1xf32> to vector<4x16x16xf32>
    %85 = arith.mulf %80, %84 : vector<4x16x16xf32>
    %86 = arith.truncf %85 : vector<4x16x16xf32> to vector<4x16x16xbf16>
    %87 = arith.truncf %72 : vector<4x16x32xf32> to vector<4x16x32xbf16>
    "tpu.trace_start"() <{level = 10 : i32, message = "hqk,hkd->hqd"}> : () -> ()
    %cst_23 = arith.constant dense<0.000000e+00> : vector<4x16x32xf32>
    %88 = tpu.matmul %86, %87, %cst_23 {dimension_numbers = #tpu.dot_dimension_numbers<[2], [1], [1], [2], [0, 0, 0, 1, 1, 2], [0], [0]>} : vector<4x16x16xbf16>, vector<4x16x32xbf16>, vector<4x16x32xf32> -> vector<4x16x32xf32>
    "tpu.trace_stop"() : () -> ()
    %89 = arith.truncf %88 : vector<4x16x32xf32> to vector<4x16x32xbf16>
    %c0_24 = arith.constant 0 : index
    %c0_25 = arith.constant 0 : index
    %c0_26 = arith.constant 0 : index
    %c0_27 = arith.constant 0 : index
    %90 = vector.load %arg7[%c0_24, %c0_25, %c0_26, %c0_27] : memref<1x4x32x128xbf16, #tpu.memory_space<vmem>>, vector<1x4x32x128xbf16>
    %91 = vector.shape_cast %90 : vector<1x4x32x128xbf16> to vector<4x32x128xbf16>
    "tpu.trace_start"() <{level = 10 : i32, message = "hqd,hdw->hqw"}> : () -> ()
    %cst_28 = arith.constant dense<0.000000e+00> : vector<4x16x128xf32>
    %92 = tpu.matmul %89, %91, %cst_28 {dimension_numbers = #tpu.dot_dimension_numbers<[2], [1], [1], [2], [0, 0, 0, 1, 1, 2], [0], [0]>} : vector<4x16x32xbf16>, vector<4x32x128xbf16>, vector<4x16x128xf32> -> vector<4x16x128xf32>
    "tpu.trace_stop"() : () -> ()
    %cst_29 = arith.constant dense<0.000000e+00> : vector<16x128xf32>
    %93 = vector.multi_reduction <add>, %92, %cst_29 [0] : vector<4x16x128xf32> to vector<16x128xf32>
    %c0_30 = arith.constant 0 : index
    %c0_31 = arith.constant 0 : index
    %c0_32 = arith.constant 0 : index
    %94 = vector.load %arg8[%c0_30, %c0_31, %c0_32] : memref<1x1x128xf32, #tpu.memory_space<vmem>>, vector<1x1x128xf32>
    %95 = vector.shape_cast %94 : vector<1x1x128xf32> to vector<128xf32>
    %96 = vector.shape_cast %95 : vector<128xf32> to vector<1x128xf32>
    %97 = vector.broadcast %96 : vector<1x128xf32> to vector<16x128xf32>
    %98 = arith.addf %93, %97 : vector<16x128xf32>
    %99 = arith.addf %3, %98 : vector<16x128xf32>
    %c0_33 = arith.constant 0 : index
    %c0_34 = arith.constant 0 : index
    %c0_35 = arith.constant 0 : index
    %100 = vector.load %arg9[%c0_33, %c0_34, %c0_35] : memref<1x1x128xf32, #tpu.memory_space<vmem>>, vector<1x1x128xf32>
    %101 = vector.shape_cast %100 : vector<1x1x128xf32> to vector<128xf32>
    %c0_36 = arith.constant 0 : index
    %c0_37 = arith.constant 0 : index
    %c0_38 = arith.constant 0 : index
    %102 = vector.load %arg10[%c0_36, %c0_37, %c0_38] : memref<1x1x128xf32, #tpu.memory_space<vmem>>, vector<1x1x128xf32>
    %103 = vector.shape_cast %102 : vector<1x1x128xf32> to vector<128xf32>
    %cst_39 = arith.constant dense<0.000000e+00> : vector<16xf32>
    %104 = vector.multi_reduction <add>, %99, %cst_39 [1] : vector<16x128xf32> to vector<16xf32>
    %105 = vector.shape_cast %104 : vector<16xf32> to vector<16x1xf32>
    %cst_40 = arith.constant 1.280000e+02 : f32
    %106 = vector.broadcast %cst_40 : f32 to vector<16x1xf32>
    %107 = arith.divf %105, %106 : vector<16x1xf32>
    %108 = vector.broadcast %107 : vector<16x1xf32> to vector<16x128xf32>
    %109 = arith.subf %99, %108 : vector<16x128xf32>
    %110 = arith.mulf %109, %109 : vector<16x128xf32>
    %cst_41 = arith.constant dense<0.000000e+00> : vector<16xf32>
    %111 = vector.multi_reduction <add>, %110, %cst_41 [1] : vector<16x128xf32> to vector<16xf32>
    %112 = vector.shape_cast %111 : vector<16xf32> to vector<16x1xf32>
    %cst_42 = arith.constant 1.280000e+02 : f32
    %113 = vector.broadcast %cst_42 : f32 to vector<16x1xf32>
    %114 = arith.divf %112, %113 : vector<16x1xf32>
    %115 = vector.broadcast %107 : vector<16x1xf32> to vector<16x128xf32>
    %116 = arith.subf %99, %115 : vector<16x128xf32>
    %cst_43 = arith.constant 9.99999974E-6 : f32
    %117 = vector.broadcast %cst_43 : f32 to vector<16x1xf32>
    %118 = arith.addf %114, %117 : vector<16x1xf32>
    %119 = math.rsqrt %118 : vector<16x1xf32>
    %120 = vector.broadcast %119 : vector<16x1xf32> to vector<16x128xf32>
    %121 = arith.mulf %116, %120 : vector<16x128xf32>
    %122 = vector.shape_cast %101 : vector<128xf32> to vector<1x128xf32>
    %123 = vector.broadcast %122 : vector<1x128xf32> to vector<16x128xf32>
    %124 = arith.mulf %121, %123 : vector<16x128xf32>
    %125 = vector.shape_cast %103 : vector<128xf32> to vector<1x128xf32>
    %126 = vector.broadcast %125 : vector<1x128xf32> to vector<16x128xf32>
    %127 = arith.addf %124, %126 : vector<16x128xf32>
    %128 = arith.truncf %127 : vector<16x128xf32> to vector<16x128xbf16>
    %c0_44 = arith.constant 0 : index
    %c0_45 = arith.constant 0 : index
    %c0_46 = arith.constant 0 : index
    %129 = vector.load %arg11[%c0_44, %c0_45, %c0_46] : memref<1x128x512xbf16, #tpu.memory_space<vmem>>, vector<1x128x512xbf16>
    %130 = vector.shape_cast %129 : vector<1x128x512xbf16> to vector<128x512xbf16>
    %cst_47 = arith.constant dense<0.000000e+00> : vector<16x512xf32>
    %131 = tpu.matmul %128, %130, %cst_47 {dimension_numbers = #tpu.dot_dimension_numbers<[1], [0], [0], [1], [0, 0, 1, 1], [], []>} : vector<16x128xbf16>, vector<128x512xbf16>, vector<16x512xf32> -> vector<16x512xf32>
    %c0_48 = arith.constant 0 : index
    %c0_49 = arith.constant 0 : index
    %c0_50 = arith.constant 0 : index
    %132 = vector.load %arg12[%c0_48, %c0_49, %c0_50] : memref<1x1x512xf32, #tpu.memory_space<vmem>>, vector<1x1x512xf32>
    %133 = vector.shape_cast %132 : vector<1x1x512xf32> to vector<512xf32>
    %134 = vector.shape_cast %133 : vector<512xf32> to vector<1x512xf32>
    %135 = vector.broadcast %134 : vector<1x512xf32> to vector<16x512xf32>
    %136 = arith.addf %131, %135 : vector<16x512xf32>
    %cst_51 = arith.constant 1.702000e+00 : f32
    %137 = vector.broadcast %cst_51 : f32 to vector<16x512xf32>
    %138 = arith.mulf %137, %136 : vector<16x512xf32>
    %139 = arith.negf %138 : vector<16x512xf32>
    %140 = math.exp %139 : vector<16x512xf32>
    %cst_52 = arith.constant 1.000000e+00 : f32
    %141 = vector.broadcast %cst_52 : f32 to vector<16x512xf32>
    %142 = arith.addf %141, %140 : vector<16x512xf32>
    %143 = arith.divf %141, %142 : vector<16x512xf32>
    %144 = arith.mulf %136, %143 : vector<16x512xf32>
    %145 = arith.truncf %144 : vector<16x512xf32> to vector<16x512xbf16>
    %c0_53 = arith.constant 0 : index
    %c0_54 = arith.constant 0 : index
    %c0_55 = arith.constant 0 : index
    %146 = vector.load %arg13[%c0_53, %c0_54, %c0_55] : memref<1x512x128xbf16, #tpu.memory_space<vmem>>, vector<1x512x128xbf16>
    %147 = vector.shape_cast %146 : vector<1x512x128xbf16> to vector<512x128xbf16>
    %cst_56 = arith.constant dense<0.000000e+00> : vector<16x128xf32>
    %148 = tpu.matmul %145, %147, %cst_56 {dimension_numbers = #tpu.dot_dimension_numbers<[1], [0], [0], [1], [0, 0, 1, 1], [], []>} : vector<16x512xbf16>, vector<512x128xbf16>, vector<16x128xf32> -> vector<16x128xf32>
    %c0_57 = arith.constant 0 : index
    %c0_58 = arith.constant 0 : index
    %c0_59 = arith.constant 0 : index
    %149 = vector.load %arg14[%c0_57, %c0_58, %c0_59] : memref<1x1x128xf32, #tpu.memory_space<vmem>>, vector<1x1x128xf32>
    %150 = vector.shape_cast %149 : vector<1x1x128xf32> to vector<128xf32>
    %151 = vector.shape_cast %150 : vector<128xf32> to vector<1x128xf32>
    %152 = vector.broadcast %151 : vector<1x128xf32> to vector<16x128xf32>
    %153 = arith.addf %148, %152 : vector<16x128xf32>
    %154 = arith.addf %99, %153 : vector<16x128xf32>
    %c0_60 = arith.constant 0 : index
    %c0_61 = arith.constant 0 : index
    %155 = vector.load %arg16[%c0_60, %c0_61] : memref<16x128xf32, #tpu.memory_space<vmem>>, vector<16x128xf32>
    tpu.vector_store %arg16[%c0_60, %c0_61], %154 {strides = array<i32>} : memref<16x128xf32, #tpu.memory_space<vmem>>, vector<16x128xf32>,
    %c1_i32 = arith.constant 1 : i32
    %156 = arith.cmpi eq, %arg1, %c1_i32 : i32
    %157 = arith.extui %156 : i1 to i32
    %c0_i32_62 = arith.constant 0 : i32
    %158 = arith.cmpi ne, %157, %c0_i32_62 : i32
    scf.if %158 {
      %c0_63 = arith.constant 0 : index
      %c0_64 = arith.constant 0 : index
      %c0_65 = arith.constant 0 : index
      %159 = vector.load %arg15[%c0_63, %c0_64, %c0_65] : memref<1x16x128xf32, #tpu.memory_space<vmem>>, vector<1x16x128xf32>
      %160 = vector.shape_cast %159 : vector<1x16x128xf32> to vector<16x128xf32>
      %161 = vector.shape_cast %154 : vector<16x128xf32> to vector<1x16x128xf32>
      tpu.vector_store %arg15[%c0_63, %c0_64, %c0_65], %161 {strides = array<i32>} : memref<1x16x128xf32, #tpu.memory_space<vmem>>, vector<1x16x128xf32>,
    } else {
    }
    return
  }
  func.func @transform_0(%arg0: i32, %arg1: i32) -> (i32, i32, i32) {
    %c0_i32 = arith.constant 0 : i32
    %c0_i32_0 = arith.constant 0 : i32
    %c0_i32_1 = arith.constant 0 : i32
    return %arg0, %c0_i32, %c0_i32_0 : i32, i32, i32
  }
  func.func @transform_1(%arg0: i32, %arg1: i32) -> (i32, i32, i32) {
    %c0_i32 = arith.constant 0 : i32
    %c0_i32_0 = arith.constant 0 : i32
    %c0_i32_1 = arith.constant 0 : i32
    return %arg1, %c0_i32, %c0_i32_0 : i32, i32, i32
  }
  func.func @transform_2(%arg0: i32, %arg1: i32) -> (i32, i32, i32) {
    %c0_i32 = arith.constant 0 : i32
    %c0_i32_0 = arith.constant 0 : i32
    %c0_i32_1 = arith.constant 0 : i32
    return %arg1, %c0_i32, %c0_i32_0 : i32, i32, i32
  }
  func.func @transform_3(%arg0: i32, %arg1: i32) -> (i32, i32, i32) {
    %c0_i32 = arith.constant 0 : i32
    %c0_i32_0 = arith.constant 0 : i32
    %c0_i32_1 = arith.constant 0 : i32
    return %arg1, %c0_i32, %c0_i32_0 : i32, i32, i32
  }
  func.func @transform_4(%arg0: i32, %arg1: i32) -> (i32, i32, i32) {
    %c0_i32 = arith.constant 0 : i32
    %c0_i32_0 = arith.constant 0 : i32
    %c0_i32_1 = arith.constant 0 : i32
    return %arg1, %c0_i32, %c0_i32_0 : i32, i32, i32
  }
  func.func @transform_5(%arg0: i32, %arg1: i32) -> (i32, i32, i32, i32) {
    %c0_i32 = arith.constant 0 : i32
    %c0_i32_0 = arith.constant 0 : i32
    %c0_i32_1 = arith.constant 0 : i32
    %c0_i32_2 = arith.constant 0 : i32
    return %arg1, %c0_i32, %c0_i32_0, %c0_i32_1 : i32, i32, i32, i32
  }
  func.func @transform_6(%arg0: i32, %arg1: i32) -> (i32, i32, i32) {
    %c0_i32 = arith.constant 0 : i32
    %c0_i32_0 = arith.constant 0 : i32
    %c0_i32_1 = arith.constant 0 : i32
    return %arg1, %c0_i32, %c0_i32_0 : i32, i32, i32
  }
  func.func @transform_7(%arg0: i32, %arg1: i32) -> (i32, i32, i32) {
    %c0_i32 = arith.constant 0 : i32
    %c0_i32_0 = arith.constant 0 : i32
    %c0_i32_1 = arith.constant 0 : i32
    return %arg1, %c0_i32, %c0_i32_0 : i32, i32, i32
  }
  func.func @transform_8(%arg0: i32, %arg1: i32) -> (i32, i32, i32) {
    %c0_i32 = arith.constant 0 : i32
    %c0_i32_0 = arith.constant 0 : i32
    %c0_i32_1 = arith.constant 0 : i32
    return %arg1, %c0_i32, %c0_i32_0 : i32, i32, i32
  }
  func.func @transform_9(%arg0: i32, %arg1: i32) -> (i32, i32, i32) {
    %c0_i32 = arith.constant 0 : i32
    %c0_i32_0 = arith.constant 0 : i32
    %c0_i32_1 = arith.constant 0 : i32
    return %arg1, %c0_i32, %c0_i32_0 : i32, i32, i32
  }
  func.func @transform_10(%arg0: i32, %arg1: i32) -> (i32, i32, i32) {
    %c0_i32 = arith.constant 0 : i32
    %c0_i32_0 = arith.constant 0 : i32
    %c0_i32_1 = arith.constant 0 : i32
    return %arg1, %c0_i32, %c0_i32_0 : i32, i32, i32
  }
  func.func @transform_11(%arg0: i32, %arg1: i32) -> (i32, i32, i32) {
    %c0_i32 = arith.constant 0 : i32
    %c0_i32_0 = arith.constant 0 : i32
    %c0_i32_1 = arith.constant 0 : i32
    return %arg1, %c0_i32, %c0_i32_0 : i32, i32, i32
  }
  func.func @transform_12(%arg0: i32, %arg1: i32) -> (i32, i32, i32) {
    %c0_i32 = arith.constant 0 : i32
    %c0_i32_0 = arith.constant 0 : i32
    %c0_i32_1 = arith.constant 0 : i32
    return %arg1, %c0_i32, %c0_i32_0 : i32, i32, i32
  }
  func.func @transform_13(%arg0: i32, %arg1: i32) -> (i32, i32, i32) {
    %c0_i32 = arith.constant 0 : i32
    %c0_i32_0 = arith.constant 0 : i32
    %c0_i32_1 = arith.constant 0 : i32
    return %arg0, %c0_i32, %c0_i32_0 : i32, i32, i32
  }
}

</mosaic_0001>

<llo_original>
// kernel: tpu_custom_call.1
$region0: #{tpu_custom_call.1}
  #allocation0 [shape = 'u32[]', space=smem, size = 0x4, offset = 0x4, fixed_abs, tag = 'smem constant byte address 0x4 - core index']
  #allocation1 [shape = 'u32[144,128]{1,0:T(1,128)}', space=vmem, size = 0x12000, scoped, tag = 'internal scratch']
  #allocation2 [shape = 'f32[16,128]{1,0:T(8,128)}', space=vmem, size = 0x2000, scoped, tag = 'scratch operand']
  %s0 = inlined_call_operand.hbm [shape: f32[2,16,128], index: 0, kind: input, shape index: {}]
  %s1 = inlined_call_operand.hbm [shape: f32[2,1,128], index: 1, kind: input, shape index: {}]
  %s2 = inlined_call_operand.hbm [shape: f32[2,1,128], index: 2, kind: input, shape index: {}]
  %s3 = inlined_call_operand.hbm [shape: bf16[2,128,384], index: 3, kind: input, shape index: {}]
  %s4 = inlined_call_operand.vmem [shape: f32[2,1,384], index: 4, kind: input, shape index: {}]
  %s5 = inlined_call_operand.hbm [shape: bf16[2,4,32,128], index: 5, kind: input, shape index: {}]
  %s6 = inlined_call_operand.vmem [shape: f32[2,1,128], index: 6, kind: input, shape index: {}]
  %s7 = inlined_call_operand.vmem [shape: f32[2,1,128], index: 7, kind: input, shape index: {}]
  %s8 = inlined_call_operand.vmem [shape: f32[2,1,128], index: 8, kind: input, shape index: {}]
  %s9 = inlined_call_operand.hbm [shape: bf16[2,128,512], index: 9, kind: input, shape index: {}]
  %s10 = inlined_call_operand.vmem [shape: f32[2,1,512], index: 10, kind: input, shape index: {}]
  %s11 = inlined_call_operand.hbm [shape: bf16[2,512,128], index: 11, kind: input, shape index: {}]
  %s12 = inlined_call_operand.vmem [shape: f32[2,1,128], index: 12, kind: input, shape index: {}]
  %s13 = inlined_call_operand.hbm [shape: f32[2,16,128], index: 13, kind: output, shape index: {}]
  %s14 = sld [smem:[#allocation0]]
  $region121: #{tpu_custom_call.1} parent=0
    _
  %s16 = ssub.s32 1, %s14
  %s17 = scalar_select 0, %s16, %s14
  $region1: #{tpu_custom_call.1} parent=0
    #allocation3 [shape = 'u8[16384]{0}', space=vmem, size = 0x4000, scoped, tag = 'input window, operand 0']
    #allocation4 [shape = 's32[2]{0}', space=sflag, size = 0x8, scoped, tag = 'scoped memory for tpu_custom_call.1']
    #allocation5 [shape = 's32[2]{0}', space=sflag, size = 0x8, scoped, tag = 'scoped memory for tpu_custom_call.1']
    #allocation6 [shape = 'u8[1024]{0}', space=vmem, size = 0x400, scoped, tag = 'input window, operand 1']
    #allocation7 [shape = 's32[2]{0}', space=sflag, size = 0x8, scoped, tag = 'scoped memory for tpu_custom_call.1']
    #allocation8 [shape = 'u8[1024]{0}', space=vmem, size = 0x400, scoped, tag = 'input window, operand 2']
    #allocation9 [shape = 'u8[196608]{0}', space=vmem, size = 0x30000, scoped, tag = 'input window, operand 3']
    #allocation10 [shape = 's32[2]{0}', space=sflag, size = 0x8, scoped, tag = 'scoped memory for tpu_custom_call.1']
    #allocation11 [shape = 'u8[65536]{0}', space=vmem, size = 0x10000, scoped, tag = 'input window, operand 5']
    #allocation12 [shape = 'u8[262144]{0}', space=vmem, size = 0x40000, scoped, tag = 'input window, operand 9']
    #allocation13 [shape = 's32[2]{0}', space=sflag, size = 0x8, scoped, tag = 'scoped memory for tpu_custom_call.1']
    #allocation14 [shape = 'u8[262144]{0}', space=vmem, size = 0x40000, scoped, tag = 'input window, operand 11']
    #allocation15 [shape = 'u8[16384]{0}', space=vmem, size = 0x4000, scoped, tag = 'output window, operand 0']
    %18 = vsyncpa [#allocation4], 0
    %s19 = scalar_lea.sflag [#allocation4], 1
    %20 = vsyncpa %s19, 0
    %21 = vsyncpa [#allocation7], 0
    %s22 = scalar_lea.sflag [#allocation7], 1
    %23 = vsyncpa %s22, 0
    %24 = vsyncpa [#allocation10], 0
    %s25 = scalar_lea.sflag [#allocation10], 1
    %26 = vsyncpa %s25, 0
    %27 = vsyncpa [#allocation13], 0
    %s28 = scalar_lea.sflag [#allocation13], 1
    %29 = vsyncpa %s28, 0
    %30 = vsyncpa [#allocation5], 0
    %s31 = scalar_lea.sflag [#allocation5], 1
    %32 = vsyncpa %s31, 0
    loop: start=0, step=1, limit=6
    $region2: #{tpu_custom_call.1} parent=1 // loop_pre_header
      _
    $region3: #{tpu_custom_call.1} parent=1 // loop_header
      %s34 = sphi 0, %s38
      %p35 = scmp.ge.s32.totalorder %s34, 6
      %s41 = sphi 0, %s53
      %s42 = sphi 0, %s49
      %s43 = sphi 0, %s41
      %s44 = sphi 0, %s42
      %s45 = sphi 0, %s43
      %s46 = sphi 0, %s44
      %s56 = sphi 0, %s58
      %s59 = sphi 0, %s56
      %s60 = sphi 0, %s59
      %s76 = sphi 0, %s60
      %s82 = sphi 0, %s84
      %s85 = sphi 0, %s82
      %s86 = sphi 0, %s85
      %s102 = sphi 0, %s86
      %s108 = sphi 0, %s110
      %s111 = sphi 0, %s108
      %s112 = sphi 0, %s111
      %s128 = sphi 0, %s112
      %s134 = sphi 0, %s136
      %s137 = sphi 0, %s134
      %s138 = sphi 0, %s137
      %s154 = sphi 0, %s138
      %s160 = sphi 0, %s162
      %s163 = sphi 0, %s160
      %s164 = sphi 0, %s163
      %s180 = sphi 0, %s164
      %s186 = sphi 0, %s188
      %s189 = sphi 0, %s186
      %s190 = sphi 0, %s189
      %s206 = sphi 0, %s190
      %s212 = sphi 0, %s214
      %s215 = sphi 0, %s212
      %s216 = sphi 0, %s215
      %s232 = sphi 0, %s216
      %s238 = sphi 0, %s240
      %s241 = sphi 0, %s238
      %s242 = sphi 0, %s241
      %s258 = sphi 0, %s242
      %s264 = sphi 0, %s266
      %s267 = sphi 0, %s264
      %s268 = sphi 0, %s267
      %s284 = sphi 0, %s268
      %s290 = sphi 0, %s292
      %s293 = sphi 0, %s290
      %s294 = sphi 0, %s293
      %s310 = sphi 0, %s294
      %s316 = sphi 0, %s318
      %s319 = sphi 0, %s316
      %s320 = sphi 0, %s319
      %s336 = sphi 0, %s320
      %s342 = sphi 0, %s344
      %s345 = sphi 0, %s342
      %s346 = sphi 0, %s345
      %s362 = sphi 0, %s346
      %s368 = sphi 0, %s370
      %s371 = sphi 0, %s368
      %s372 = sphi 0, %s371
      %s388 = sphi 0, %s372
      %s394 = sphi 0, %s396
      %s397 = sphi 0, %s394
      %s398 = sphi 0, %s397
      %s414 = sphi 0, %s398
    $region4: #{tpu_custom_call.1} parent=1 // loop_header_branch
      %37 = sbr.rel (%p35) target = $region8
    $region5: #{tpu_custom_call.1} parent=1 // loop_body
      %s39 = ssub.s32 %s34, 1
      %s40 = ssub.s32 %s34, 2
      %s47 = sadd.s32 1, %s42
      %p48 = scmp.ge.s32.totalorder %s47, 2
      %s49 = scalar_select %p48, 0, %s47
      %s50 = sadd.s32 1, %s41
      %s51 = scalar_select %p48, %s50, %s41
      %p52 = scmp.ge.s32.totalorder %s51, 2
      %s53 = scalar_select %p52, 0, %s51
      %s54 = ssub.s32 %s41, %s53
      %p55 = scmp.eq.s32.totalorder %s54, 0
      %s57 = sadd.s32 %s56, 1
      %s58 = scalar_select %p55, %s56, %s57
      %p61 = pneg %p55
      %p62 = scmp.eq.s32.totalorder %s34, 3
      %p63 = por %p61, %p62
      %p64 = scmp.ne.s32.totalorder %s56, %s59
      %p65 = scmp.eq.s32.totalorder %s34, 0
      %p66 = por %p64, %p65
      %p67 = scmp.ne.s32.totalorder %s56, %s59
      %p68 = scmp.eq.s32.totalorder %s39, 3
      %p69 = por %p67, %p68
      %p70 = scmp.ne.s32.totalorder %s59, %s60
      %p71 = scmp.eq.s32.totalorder %s39, 0
      %p72 = por %p70, %p71
      %p73 = scmp.ne.s32.totalorder %s59, %s60
      %p74 = scmp.eq.s32.totalorder %s40, 3
      %p75 = por %p73, %p74
      %p77 = scmp.ne.s32.totalorder %s60, %s76
      %p78 = scmp.eq.s32.totalorder %s40, 0
      %p79 = por %p77, %p78
      %s80 = ssub.s32 %s42, %s49
      %p81 = scmp.eq.s32.totalorder %s80, 0
      %s83 = sadd.s32 %s82, 1
      %s84 = scalar_select %p81, %s82, %s83
      %p87 = pneg %p81
      %p88 = scmp.eq.s32.totalorder %s34, 3
      %p89 = por %p87, %p88
      %p90 = scmp.ne.s32.totalorder %s82, %s85
      %p91 = scmp.eq.s32.totalorder %s34, 0
      %p92 = por %p90, %p91
      %p93 = scmp.ne.s32.totalorder %s82, %s85
      %p94 = scmp.eq.s32.totalorder %s39, 3
      %p95 = por %p93, %p94
      %p96 = scmp.ne.s32.totalorder %s85, %s86
      %p97 = scmp.eq.s32.totalorder %s39, 0
      %p98 = por %p96, %p97
      %p99 = scmp.ne.s32.totalorder %s85, %s86
      %p100 = scmp.eq.s32.totalorder %s40, 3
      %p101 = por %p99, %p100
      %p103 = scmp.ne.s32.totalorder %s86, %s102
      %p104 = scmp.eq.s32.totalorder %s40, 0
      %p105 = por %p103, %p104
      %s106 = ssub.s32 %s42, %s49
      %p107 = scmp.eq.s32.totalorder %s106, 0
      %s109 = sadd.s32 %s108, 1
      %s110 = scalar_select %p107, %s108, %s109
      %p113 = pneg %p107
      %p114 = scmp.eq.s32.totalorder %s34, 3
      %p115 = por %p113, %p114
      %p116 = scmp.ne.s32.totalorder %s108, %s111
      %p117 = scmp.eq.s32.totalorder %s34, 0
      %p118 = por %p116, %p117
      %p119 = scmp.ne.s32.totalorder %s108, %s111
      %p120 = scmp.eq.s32.totalorder %s39, 3
      %p121 = por %p119, %p120
      %p122 = scmp.ne.s32.totalorder %s111, %s112
      %p123 = scmp.eq.s32.totalorder %s39, 0
      %p124 = por %p122, %p123
      %p125 = scmp.ne.s32.totalorder %s111, %s112
      %p126 = scmp.eq.s32.totalorder %s40, 3
      %p127 = por %p125, %p126
      %p129 = scmp.ne.s32.totalorder %s112, %s128
      %p130 = scmp.eq.s32.totalorder %s40, 0
      %p131 = por %p129, %p130
      %s132 = ssub.s32 %s42, %s49
      %p133 = scmp.eq.s32.totalorder %s132, 0
      %s135 = sadd.s32 %s134, 1
      %s136 = scalar_select %p133, %s134, %s135
      %p139 = pneg %p133
      %p140 = scmp.eq.s32.totalorder %s34, 3
      %p141 = por %p139, %p140
      %p142 = scmp.ne.s32.totalorder %s134, %s137
      %p143 = scmp.eq.s32.totalorder %s34, 0
      %p144 = por %p142, %p143
      %p145 = scmp.ne.s32.totalorder %s134, %s137
      %p146 = scmp.eq.s32.totalorder %s39, 3
      %p147 = por %p145, %p146
      %p148 = scmp.ne.s32.totalorder %s137, %s138
      %p149 = scmp.eq.s32.totalorder %s39, 0
      %p150 = por %p148, %p149
      %p151 = scmp.ne.s32.totalorder %s137, %s138
      %p152 = scmp.eq.s32.totalorder %s40, 3
      %p153 = por %p151, %p152
      %p155 = scmp.ne.s32.totalorder %s138, %s154
      %p156 = scmp.eq.s32.totalorder %s40, 0
      %p157 = por %p155, %p156
      %s158 = ssub.s32 %s42, %s49
      %p159 = scmp.eq.s32.totalorder %s158, 0
      %s161 = sadd.s32 %s160, 1
      %s162 = scalar_select %p159, %s160, %s161
      %p165 = pneg %p159
      %p166 = scmp.eq.s32.totalorder %s34, 3
      %p167 = por %p165, %p166
      %p168 = scmp.ne.s32.totalorder %s160, %s163
      %p169 = scmp.eq.s32.totalorder %s34, 0
      %p170 = por %p168, %p169
      %p171 = scmp.ne.s32.totalorder %s160, %s163
      %p172 = scmp.eq.s32.totalorder %s39, 3
      %p173 = por %p171, %p172
      %p174 = scmp.ne.s32.totalorder %s163, %s164
      %p175 = scmp.eq.s32.totalorder %s39, 0
      %p176 = por %p174, %p175
      %p177 = scmp.ne.s32.totalorder %s163, %s164
      %p178 = scmp.eq.s32.totalorder %s40, 3
      %p179 = por %p177, %p178
      %p181 = scmp.ne.s32.totalorder %s164, %s180
      %p182 = scmp.eq.s32.totalorder %s40, 0
      %p183 = por %p181, %p182
      %s184 = ssub.s32 %s42, %s49
      %p185 = scmp.eq.s32.totalorder %s184, 0
      %s187 = sadd.s32 %s186, 1
      %s188 = scalar_select %p185, %s186, %s187
      %p191 = pneg %p185
      %p192 = scmp.eq.s32.totalorder %s34, 3
      %p193 = por %p191, %p192
      %p194 = scmp.ne.s32.totalorder %s186, %s189
      %p195 = scmp.eq.s32.totalorder %s34, 0
      %p196 = por %p194, %p195
      %p197 = scmp.ne.s32.totalorder %s186, %s189
      %p198 = scmp.eq.s32.totalorder %s39, 3
      %p199 = por %p197, %p198
      %p200 = scmp.ne.s32.totalorder %s189, %s190
      %p201 = scmp.eq.s32.totalorder %s39, 0
      %p202 = por %p200, %p201
      %p203 = scmp.ne.s32.totalorder %s189, %s190
      %p204 = scmp.eq.s32.totalorder %s40, 3
      %p205 = por %p203, %p204
      %p207 = scmp.ne.s32.totalorder %s190, %s206
      %p208 = scmp.eq.s32.totalorder %s40, 0
      %p209 = por %p207, %p208
      %s210 = ssub.s32 %s42, %s49
      %p211 = scmp.eq.s32.totalorder %s210, 0
      %s213 = sadd.s32 %s212, 1
      %s214 = scalar_select %p211, %s212, %s213
      %p217 = pneg %p211
      %p218 = scmp.eq.s32.totalorder %s34, 3
      %p219 = por %p217, %p218
      %p220 = scmp.ne.s32.totalorder %s212, %s215
      %p221 = scmp.eq.s32.totalorder %s34, 0
      %p222 = por %p220, %p221
      %p223 = scmp.ne.s32.totalorder %s212, %s215
      %p224 = scmp.eq.s32.totalorder %s39, 3
      %p225 = por %p223, %p224
      %p226 = scmp.ne.s32.totalorder %s215, %s216
      %p227 = scmp.eq.s32.totalorder %s39, 0
      %p228 = por %p226, %p227
      %p229 = scmp.ne.s32.totalorder %s215, %s216
      %p230 = scmp.eq.s32.totalorder %s40, 3
      %p231 = por %p229, %p230
      %p233 = scmp.ne.s32.totalorder %s216, %s232
      %p234 = scmp.eq.s32.totalorder %s40, 0
      %p235 = por %p233, %p234
      %s236 = ssub.s32 %s42, %s49
      %p237 = scmp.eq.s32.totalorder %s236, 0
      %s239 = sadd.s32 %s238, 1
      %s240 = scalar_select %p237, %s238, %s239
      %p243 = pneg %p237
      %p244 = scmp.eq.s32.totalorder %s34, 3
      %p245 = por %p243, %p244
      %p246 = scmp.ne.s32.totalorder %s238, %s241
      %p247 = scmp.eq.s32.totalorder %s34, 0
      %p248 = por %p246, %p247
      %p249 = scmp.ne.s32.totalorder %s238, %s241
      %p250 = scmp.eq.s32.totalorder %s39, 3
      %p251 = por %p249, %p250
      %p252 = scmp.ne.s32.totalorder %s241, %s242
      %p253 = scmp.eq.s32.totalorder %s39, 0
      %p254 = por %p252, %p253
      %p255 = scmp.ne.s32.totalorder %s241, %s242
      %p256 = scmp.eq.s32.totalorder %s40, 3
      %p257 = por %p255, %p256
      %p259 = scmp.ne.s32.totalorder %s242, %s258
      %p260 = scmp.eq.s32.totalorder %s40, 0
      %p261 = por %p259, %p260
      %s262 = ssub.s32 %s42, %s49
      %p263 = scmp.eq.s32.totalorder %s262, 0
      %s265 = sadd.s32 %s264, 1
      %s266 = scalar_select %p263, %s264, %s265
      %p269 = pneg %p263
      %p270 = scmp.eq.s32.totalorder %s34, 3
      %p271 = por %p269, %p270
      %p272 = scmp.ne.s32.totalorder %s264, %s267
      %p273 = scmp.eq.s32.totalorder %s34, 0
      %p274 = por %p272, %p273
      %p275 = scmp.ne.s32.totalorder %s264, %s267
      %p276 = scmp.eq.s32.totalorder %s39, 3
      %p277 = por %p275, %p276
      %p278 = scmp.ne.s32.totalorder %s267, %s268
      %p279 = scmp.eq.s32.totalorder %s39, 0
      %p280 = por %p278, %p279
      %p281 = scmp.ne.s32.totalorder %s267, %s268
      %p282 = scmp.eq.s32.totalorder %s40, 3
      %p283 = por %p281, %p282
      %p285 = scmp.ne.s32.totalorder %s268, %s284
      %p286 = scmp.eq.s32.totalorder %s40, 0
      %p287 = por %p285, %p286
      %s288 = ssub.s32 %s42, %s49
      %p289 = scmp.eq.s32.totalorder %s288, 0
      %s291 = sadd.s32 %s290, 1
      %s292 = scalar_select %p289, %s290, %s291
      %p295 = pneg %p289
      %p296 = scmp.eq.s32.totalorder %s34, 3
      %p297 = por %p295, %p296
      %p298 = scmp.ne.s32.totalorder %s290, %s293
      %p299 = scmp.eq.s32.totalorder %s34, 0
      %p300 = por %p298, %p299
      %p301 = scmp.ne.s32.totalorder %s290, %s293
      %p302 = scmp.eq.s32.totalorder %s39, 3
      %p303 = por %p301, %p302
      %p304 = scmp.ne.s32.totalorder %s293, %s294
      %p305 = scmp.eq.s32.totalorder %s39, 0
      %p306 = por %p304, %p305
      %p307 = scmp.ne.s32.totalorder %s293, %s294
      %p308 = scmp.eq.s32.totalorder %s40, 3
      %p309 = por %p307, %p308
      %p311 = scmp.ne.s32.totalorder %s294, %s310
      %p312 = scmp.eq.s32.totalorder %s40, 0
      %p313 = por %p311, %p312
      %s314 = ssub.s32 %s42, %s49
      %p315 = scmp.eq.s32.totalorder %s314, 0
      %s317 = sadd.s32 %s316, 1
      %s318 = scalar_select %p315, %s316, %s317
      %p321 = pneg %p315
      %p322 = scmp.eq.s32.totalorder %s34, 3
      %p323 = por %p321, %p322
      %p324 = scmp.ne.s32.totalorder %s316, %s319
      %p325 = scmp.eq.s32.totalorder %s34, 0
      %p326 = por %p324, %p325
      %p327 = scmp.ne.s32.totalorder %s316, %s319
      %p328 = scmp.eq.s32.totalorder %s39, 3
      %p329 = por %p327, %p328
      %p330 = scmp.ne.s32.totalorder %s319, %s320
      %p331 = scmp.eq.s32.totalorder %s39, 0
      %p332 = por %p330, %p331
      %p333 = scmp.ne.s32.totalorder %s319, %s320
      %p334 = scmp.eq.s32.totalorder %s40, 3
      %p335 = por %p333, %p334
      %p337 = scmp.ne.s32.totalorder %s320, %s336
      %p338 = scmp.eq.s32.totalorder %s40, 0
      %p339 = por %p337, %p338
      %s340 = ssub.s32 %s42, %s49
      %p341 = scmp.eq.s32.totalorder %s340, 0
      %s343 = sadd.s32 %s342, 1
      %s344 = scalar_select %p341, %s342, %s343
      %p347 = pneg %p341
      %p348 = scmp.eq.s32.totalorder %s34, 3
      %p349 = por %p347, %p348
      %p350 = scmp.ne.s32.totalorder %s342, %s345
      %p351 = scmp.eq.s32.totalorder %s34, 0
      %p352 = por %p350, %p351
      %p353 = scmp.ne.s32.totalorder %s342, %s345
      %p354 = scmp.eq.s32.totalorder %s39, 3
      %p355 = por %p353, %p354
      %p356 = scmp.ne.s32.totalorder %s345, %s346
      %p357 = scmp.eq.s32.totalorder %s39, 0
      %p358 = por %p356, %p357
      %p359 = scmp.ne.s32.totalorder %s345, %s346
      %p360 = scmp.eq.s32.totalorder %s40, 3
      %p361 = por %p359, %p360
      %p363 = scmp.ne.s32.totalorder %s346, %s362
      %p364 = scmp.eq.s32.totalorder %s40, 0
      %p365 = por %p363, %p364
      %s366 = ssub.s32 %s42, %s49
      %p367 = scmp.eq.s32.totalorder %s366, 0
      %s369 = sadd.s32 %s368, 1
      %s370 = scalar_select %p367, %s368, %s369
      %p373 = pneg %p367
      %p374 = scmp.eq.s32.totalorder %s34, 3
      %p375 = por %p373, %p374
      %p376 = scmp.ne.s32.totalorder %s368, %s371
      %p377 = scmp.eq.s32.totalorder %s34, 0
      %p378 = por %p376, %p377
      %p379 = scmp.ne.s32.totalorder %s368, %s371
      %p380 = scmp.eq.s32.totalorder %s39, 3
      %p381 = por %p379, %p380
      %p382 = scmp.ne.s32.totalorder %s371, %s372
      %p383 = scmp.eq.s32.totalorder %s39, 0
      %p384 = por %p382, %p383
      %p385 = scmp.ne.s32.totalorder %s371, %s372
      %p386 = scmp.eq.s32.totalorder %s40, 3
      %p387 = por %p385, %p386
      %p389 = scmp.ne.s32.totalorder %s372, %s388
      %p390 = scmp.eq.s32.totalorder %s40, 0
      %p391 = por %p389, %p390
      %s392 = ssub.s32 %s41, %s53
      %p393 = scmp.eq.s32.totalorder %s392, 0
      %s395 = sadd.s32 %s394, 1
      %s396 = scalar_select %p393, %s394, %s395
      %p399 = pneg %p393
      %p400 = scmp.eq.s32.totalorder %s34, 3
      %p401 = por %p399, %p400
      %p402 = scmp.ne.s32.totalorder %s394, %s397
      %p403 = scmp.eq.s32.totalorder %s34, 0
      %p404 = por %p402, %p403
      %p405 = scmp.ne.s32.totalorder %s394, %s397
      %p406 = scmp.eq.s32.totalorder %s39, 3
      %p407 = por %p405, %p406
      %p408 = scmp.ne.s32.totalorder %s397, %s398
      %p409 = scmp.eq.s32.totalorder %s39, 0
      %p410 = por %p408, %p409
      %p411 = scmp.ne.s32.totalorder %s397, %s398
      %p412 = scmp.eq.s32.totalorder %s40, 3
      %p413 = por %p411, %p412
      %p415 = scmp.ne.s32.totalorder %s398, %s414
      %p416 = scmp.eq.s32.totalorder %s40, 0
      %p417 = por %p415, %p416
      %p418 = scmp.le.s32.totalorder 1, %s34
      %p419 = scmp.lt.s32.totalorder %s34, 5
      %p420 = pnand %p418, %p419
      %p421 = pneg %p420
      // Predicated region
      $region9: #{tpu_custom_call.1} parent=5 // pred_check
        _
      $region10: #{tpu_custom_call.1} parent=5 // pred_check_branch
        %423 = sbr.rel (%p420) target = $region12
      $region11: #{tpu_custom_call.1} parent=5 // pred_region
        %s424 = ssub.s32 %s34, 1
      $region12: #{tpu_custom_call.1} parent=5 // pred_fallthru
        _
      %p425 = scmp.lt.s32.totalorder %s34, 4
      // Predicated region
      $region13: #{tpu_custom_call.1} parent=5 // pred_check
        %p426 = pneg %p425
      $region14: #{tpu_custom_call.1} parent=5 // pred_check_branch
        %428 = sbr.rel (%p426) target = $region16
      $region15: #{tpu_custom_call.1} parent=5 // pred_region
        // Predicated region
        $region17: #{tpu_custom_call.1} parent=15 // pred_check
          %p429 = pneg %p66
        $region18: #{tpu_custom_call.1} parent=15 // pred_check_branch
          %431 = sbr.rel (%p429) target = $region20
        $region19: #{tpu_custom_call.1} parent=15 // pred_region
          %s432 = sand.u32 %s56, 1
          %s433 = scalar_lea.sflag [#allocation4], %s432
          %s434 = sand.u32 %s56, 1
          %s435 = smul.addr %s434, 16
          %s436 = scalar_lea.vmem [#allocation3], %s435
          %s438 = ssub.s32 256, 256
          %439 = vsyncadd %s433, %s438
          %s440 = smul.addr %s41, 2
          %s441 = smul.addr %s440, 128
          %s442 = scalar_lea.hbm %s0, %s441
          %s443 = sshll.u32 %s436, 4
          %s444 = int_to_ptr.vmem [resolvable:$true] %s443
          %449 = dma.hbm_to_vmem [thread:$0]  %s442, 256, %s444, %s433, 128, 128, 8
        $region20: #{tpu_custom_call.1} parent=15 // pred_fallthru
          _
        // Predicated region
        $region21: #{tpu_custom_call.1} parent=15 // pred_check
          %p450 = pneg %p92
        $region22: #{tpu_custom_call.1} parent=15 // pred_check_branch
          %452 = sbr.rel (%p450) target = $region24
        $region23: #{tpu_custom_call.1} parent=15 // pred_region
          %s453 = sand.u32 %s34, 1
          %s454 = scalar_lea.sflag [#allocation7], %s453
          %s455 = sand.u32 %s82, 1
          %s456 = scalar_lea.vmem [#allocation6], %s455
          %s458 = ssub.s32 16, 16
          %459 = vsyncadd %s454, %s458
          %s460 = smul.addr %s42, 16
          %s461 = scalar_lea.hbm %s1, %s460
          %s463 = sshll.u32 %s456, 4
          %s464 = int_to_ptr.vmem [resolvable:$true] %s463
          %466 = dma.hbm_to_vmem [thread:$0]  %s461, 16, %s464, %s454
        $region24: #{tpu_custom_call.1} parent=15 // pred_fallthru
          _
        // Predicated region
        $region25: #{tpu_custom_call.1} parent=15 // pred_check
          %p467 = pneg %p118
        $region26: #{tpu_custom_call.1} parent=15 // pred_check_branch
          %469 = sbr.rel (%p467) target = $region28
        $region27: #{tpu_custom_call.1} parent=15 // pred_region
          %s470 = sand.u32 %s34, 1
          %s471 = scalar_lea.sflag [#allocation7], %s470
          %s472 = sand.u32 %s108, 1
          %s473 = scalar_lea.vmem [#allocation8], %s472
          %s475 = ssub.s32 16, 16
          %476 = vsyncadd %s471, %s475
          %s477 = smul.addr %s42, 16
          %s478 = scalar_lea.hbm %s2, %s477
          %s480 = sshll.u32 %s473, 4
          %s481 = int_to_ptr.vmem [resolvable:$true] %s480
          %483 = dma.hbm_to_vmem [thread:$0]  %s478, 16, %s481, %s471
        $region28: #{tpu_custom_call.1} parent=15 // pred_fallthru
          _
        // Predicated region
        $region29: #{tpu_custom_call.1} parent=15 // pred_check
          %p484 = pneg %p144
        $region30: #{tpu_custom_call.1} parent=15 // pred_check_branch
          %486 = sbr.rel (%p484) target = $region32
        $region31: #{tpu_custom_call.1} parent=15 // pred_region
          %s487 = sand.u32 %s34, 1
          %s488 = scalar_lea.sflag [#allocation10], %s487
          %s489 = sand.u32 %s134, 1
          %s490 = smul.addr %s489, 192
          %s491 = scalar_lea.vmem [#allocation9], %s490
          %s493 = ssub.s32 3072, 3072
          %494 = vsyncadd %s488, %s493
          %s495 = smul.addr %s42, 48
          %s496 = smul.addr %s495, 64
          %s497 = scalar_lea.hbm %s3, %s496
          %s498 = sshll.u32 %s491, 4
          %s499 = int_to_ptr.vmem [resolvable:$true] %s498
          %504 = dma.hbm_to_vmem [thread:$0]  %s497, 3072, %s499, %s488, 192, 192, 12
        $region32: #{tpu_custom_call.1} parent=15 // pred_fallthru
          _
        // Predicated region
        $region33: #{tpu_custom_call.1} parent=15 // pred_check
          %p505 = pneg %p170
        $region34: #{tpu_custom_call.1} parent=15 // pred_check_branch
          %507 = sbr.rel (%p505) target = $region36
        $region35: #{tpu_custom_call.1} parent=15 // pred_region
          %p508 = scmp.lt.s32.totalorder %s42, 1
          %s509 = scalar_select %p508, %s42, 1
          %s510 = smul.addr %s509, 3
          %s511 = scalar_lea.vmem %s4, %s510
        $region36: #{tpu_custom_call.1} parent=15 // pred_fallthru
          _
        // Predicated region
        $region37: #{tpu_custom_call.1} parent=15 // pred_check
          %p512 = pneg %p196
        $region38: #{tpu_custom_call.1} parent=15 // pred_check_branch
          %514 = sbr.rel (%p512) target = $region40
        $region39: #{tpu_custom_call.1} parent=15 // pred_region
          %s515 = sand.u32 %s34, 1
          %s516 = scalar_lea.sflag [#allocation10], %s515
          %s517 = sand.u32 %s186, 1
          %s518 = smul.addr %s517, 64
          %s519 = scalar_lea.vmem [#allocation11], %s518
          %s521 = ssub.s32 1024, 1024
          %522 = vsyncadd %s516, %s521
          %s523 = smul.addr %s42, 16
          %s524 = smul.addr %s523, 64
          %s525 = scalar_lea.hbm %s5, %s524
          %s526 = sshll.u32 %s519, 4
          %s527 = int_to_ptr.vmem [resolvable:$true] %s526
          %532 = dma.hbm_to_vmem [thread:$0]  %s525, 1024, %s527, %s516, 64, 64, 4
        $region40: #{tpu_custom_call.1} parent=15 // pred_fallthru
          _
        // Predicated region
        $region41: #{tpu_custom_call.1} parent=15 // pred_check
          %p533 = pneg %p222
        $region42: #{tpu_custom_call.1} parent=15 // pred_check_branch
          %535 = sbr.rel (%p533) target = $region44
        $region43: #{tpu_custom_call.1} parent=15 // pred_region
          %p536 = scmp.lt.s32.totalorder %s42, 1
          %s537 = scalar_select %p536, %s42, 1
          %s538 = scalar_lea.vmem %s6, %s537
        $region44: #{tpu_custom_call.1} parent=15 // pred_fallthru
          _
        // Predicated region
        $region45: #{tpu_custom_call.1} parent=15 // pred_check
          %p539 = pneg %p248
        $region46: #{tpu_custom_call.1} parent=15 // pred_check_branch
          %541 = sbr.rel (%p539) target = $region48
        $region47: #{tpu_custom_call.1} parent=15 // pred_region
          %p542 = scmp.lt.s32.totalorder %s42, 1
          %s543 = scalar_select %p542, %s42, 1
          %s544 = scalar_lea.vmem %s7, %s543
        $region48: #{tpu_custom_call.1} parent=15 // pred_fallthru
          _
        // Predicated region
        $region49: #{tpu_custom_call.1} parent=15 // pred_check
          %p545 = pneg %p274
        $region50: #{tpu_custom_call.1} parent=15 // pred_check_branch
          %547 = sbr.rel (%p545) target = $region52
        $region51: #{tpu_custom_call.1} parent=15 // pred_region
          %p548 = scmp.lt.s32.totalorder %s42, 1
          %s549 = scalar_select %p548, %s42, 1
          %s550 = scalar_lea.vmem %s8, %s549
        $region52: #{tpu_custom_call.1} parent=15 // pred_fallthru
          _
        // Predicated region
        $region53: #{tpu_custom_call.1} parent=15 // pred_check
          %p551 = pneg %p300
        $region54: #{tpu_custom_call.1} parent=15 // pred_check_branch
          %553 = sbr.rel (%p551) target = $region56
        $region55: #{tpu_custom_call.1} parent=15 // pred_region
          %s554 = sand.u32 %s34, 1
          %s555 = scalar_lea.sflag [#allocation13], %s554
          %s556 = sand.u32 %s290, 1
          %s557 = smul.addr %s556, 256
          %s558 = scalar_lea.vmem [#allocation12], %s557
          %s560 = ssub.s32 4096, 4096
          %561 = vsyncadd %s555, %s560
          %s562 = smul.addr %s42, 64
          %s563 = smul.addr %s562, 64
          %s564 = scalar_lea.hbm %s9, %s563
          %s565 = sshll.u32 %s558, 4
          %s566 = int_to_ptr.vmem [resolvable:$true] %s565
          %571 = dma.hbm_to_vmem [thread:$0]  %s564, 4096, %s566, %s555, 256, 256, 16
        $region56: #{tpu_custom_call.1} parent=15 // pred_fallthru
          _
        // Predicated region
        $region57: #{tpu_custom_call.1} parent=15 // pred_check
          %p572 = pneg %p326
        $region58: #{tpu_custom_call.1} parent=15 // pred_check_branch
          %574 = sbr.rel (%p572) target = $region60
        $region59: #{tpu_custom_call.1} parent=15 // pred_region
          %p575 = scmp.lt.s32.totalorder %s42, 1
          %s576 = scalar_select %p575, %s42, 1
          %s577 = smul.addr %s576, 4
          %s578 = scalar_lea.vmem %s10, %s577
        $region60: #{tpu_custom_call.1} parent=15 // pred_fallthru
          _
        // Predicated region
        $region61: #{tpu_custom_call.1} parent=15 // pred_check
          %p579 = pneg %p352
        $region62: #{tpu_custom_call.1} parent=15 // pred_check_branch
          %581 = sbr.rel (%p579) target = $region64
        $region63: #{tpu_custom_call.1} parent=15 // pred_region
          %s582 = sand.u32 %s34, 1
          %s583 = scalar_lea.sflag [#allocation13], %s582
          %s584 = sand.u32 %s342, 1
          %s585 = smul.addr %s584, 256
          %s586 = scalar_lea.vmem [#allocation14], %s585
          %s588 = ssub.s32 4096, 4096
          %589 = vsyncadd %s583, %s588
          %s590 = smul.addr %s42, 64
          %s591 = smul.addr %s590, 64
          %s592 = scalar_lea.hbm %s11, %s591
          %s593 = sshll.u32 %s586, 4
          %s594 = int_to_ptr.vmem [resolvable:$true] %s593
          %599 = dma.hbm_to_vmem [thread:$0]  %s592, 4096, %s594, %s583, 64, 64, 4
        $region64: #{tpu_custom_call.1} parent=15 // pred_fallthru
          _
        // Predicated region
        $region65: #{tpu_custom_call.1} parent=15 // pred_check
          %p600 = pneg %p378
        $region66: #{tpu_custom_call.1} parent=15 // pred_check_branch
          %602 = sbr.rel (%p600) target = $region68
        $region67: #{tpu_custom_call.1} parent=15 // pred_region
          %p603 = scmp.lt.s32.totalorder %s42, 1
          %s604 = scalar_select %p603, %s42, 1
          %s605 = scalar_lea.vmem %s12, %s604
        $region68: #{tpu_custom_call.1} parent=15 // pred_fallthru
          _
      $region16: #{tpu_custom_call.1} parent=5 // pred_fallthru
        _
      %p606 = scmp.le.s32.totalorder 1, %s34
      %p607 = scmp.lt.s32.totalorder %s34, 5
      %p608 = pnand %p606, %p607
      %p609 = pneg %p608
      // Predicated region
      $region69: #{tpu_custom_call.1} parent=5 // pred_check
        _
      $region70: #{tpu_custom_call.1} parent=5 // pred_check_branch
        %611 = sbr.rel (%p608) target = $region72
      $region71: #{tpu_custom_call.1} parent=5 // pred_region
        %s612 = ssub.s32 %s34, 1
        %s613 = sand.u32 %s59, 1
        %s614 = scalar_lea.sflag [#allocation4], %s613
        %s615 = sand.u32 %s59, 1
        %s616 = smul.addr %s615, 16
        %s617 = scalar_lea.vmem [#allocation3], %s616
        // Predicated region
        $region73: #{tpu_custom_call.1} parent=71 // pred_check
          %p618 = pneg %p72
        $region74: #{tpu_custom_call.1} parent=71 // pred_check_branch
          %620 = sbr.rel (%p618) target = $region76
        $region75: #{tpu_custom_call.1} parent=71 // pred_region
          %621 = dma.done %s614, 256
        $region76: #{tpu_custom_call.1} parent=71 // pred_fallthru
          _
        %s622 = sand.u32 %s39, 1
        %s623 = scalar_lea.sflag [#allocation7], %s622
        %s624 = sand.u32 %s85, 1
        %s625 = scalar_lea.vmem [#allocation6], %s624
        // Predicated region
        $region77: #{tpu_custom_call.1} parent=71 // pred_check
          %p626 = pneg %p98
        $region78: #{tpu_custom_call.1} parent=71 // pred_check_branch
          %628 = sbr.rel (%p626) target = $region80
        $region79: #{tpu_custom_call.1} parent=71 // pred_region
          %629 = dma.done %s623, 16
        $region80: #{tpu_custom_call.1} parent=71 // pred_fallthru
          _
        %s630 = sand.u32 %s39, 1
        %s631 = scalar_lea.sflag [#allocation7], %s630
        %s632 = sand.u32 %s111, 1
        %s633 = scalar_lea.vmem [#allocation8], %s632
        // Predicated region
        $region81: #{tpu_custom_call.1} parent=71 // pred_check
          %p634 = pneg %p124
        $region82: #{tpu_custom_call.1} parent=71 // pred_check_branch
          %636 = sbr.rel (%p634) target = $region84
        $region83: #{tpu_custom_call.1} parent=71 // pred_region
          %637 = dma.done %s631, 16
        $region84: #{tpu_custom_call.1} parent=71 // pred_fallthru
          _
        %s638 = sand.u32 %s39, 1
        %s639 = scalar_lea.sflag [#allocation10], %s638
        %s640 = sand.u32 %s137, 1
        %s641 = smul.addr %s640, 192
        %s642 = scalar_lea.vmem [#allocation9], %s641
        // Predicated region
        $region85: #{tpu_custom_call.1} parent=71 // pred_check
          %p643 = pneg %p150
        $region86: #{tpu_custom_call.1} parent=71 // pred_check_branch
          %645 = sbr.rel (%p643) target = $region88
        $region87: #{tpu_custom_call.1} parent=71 // pred_region
          %646 = dma.done %s639, 3072
        $region88: #{tpu_custom_call.1} parent=71 // pred_fallthru
          _
        %s647 = sand.u32 %s39, 1
        %s648 = scalar_lea.sflag [#allocation10], %s647
        %s649 = sand.u32 %s189, 1
        %s650 = smul.addr %s649, 64
        %s651 = scalar_lea.vmem [#allocation11], %s650
        // Predicated region
        $region89: #{tpu_custom_call.1} parent=71 // pred_check
          %p652 = pneg %p202
        $region90: #{tpu_custom_call.1} parent=71 // pred_check_branch
          %654 = sbr.rel (%p652) target = $region92
        $region91: #{tpu_custom_call.1} parent=71 // pred_region
          %655 = dma.done %s648, 1024
        $region92: #{tpu_custom_call.1} parent=71 // pred_fallthru
          _
        %s656 = sand.u32 %s39, 1
        %s657 = scalar_lea.sflag [#allocation13], %s656
        %s658 = sand.u32 %s293, 1
        %s659 = smul.addr %s658, 256
        %s660 = scalar_lea.vmem [#allocation12], %s659
        // Predicated region
        $region93: #{tpu_custom_call.1} parent=71 // pred_check
          %p661 = pneg %p306
        $region94: #{tpu_custom_call.1} parent=71 // pred_check_branch
          %663 = sbr.rel (%p661) target = $region96
        $region95: #{tpu_custom_call.1} parent=71 // pred_region
          %664 = dma.done %s657, 4096
        $region96: #{tpu_custom_call.1} parent=71 // pred_fallthru
          _
        %s665 = sand.u32 %s39, 1
        %s666 = scalar_lea.sflag [#allocation13], %s665
        %s667 = sand.u32 %s345, 1
        %s668 = smul.addr %s667, 256
        %s669 = scalar_lea.vmem [#allocation14], %s668
        // Predicated region
        $region97: #{tpu_custom_call.1} parent=71 // pred_check
          %p670 = pneg %p358
        $region98: #{tpu_custom_call.1} parent=71 // pred_check_branch
          %672 = sbr.rel (%p670) target = $region100
        $region99: #{tpu_custom_call.1} parent=71 // pred_region
          %673 = dma.done %s666, 4096
        $region100: #{tpu_custom_call.1} parent=71 // pred_fallthru
          _
        %s674 = sand.u32 %s59, 1
        %s675 = scalar_lea.sflag [#allocation4], %s674
        %s676 = sand.u32 %s59, 1
        %s677 = smul.addr %s676, 16
        %s678 = scalar_lea.vmem [#allocation3], %s677
        %p679 = pneg %p72
        %p680 = pneg %p69
        %s681 = sand.u32 %s39, 1
        %s682 = scalar_lea.sflag [#allocation7], %s681
        %s683 = sand.u32 %s85, 1
        %s684 = scalar_lea.vmem [#allocation6], %s683
        %p685 = pneg %p98
        %p686 = pneg %p95
        %s687 = sand.u32 %s39, 1
        %s688 = scalar_lea.sflag [#allocation7], %s687
        %s689 = sand.u32 %s111, 1
        %s690 = scalar_lea.vmem [#allocation8], %s689
        %p691 = pneg %p124
        %p692 = pneg %p121
        %s693 = sand.u32 %s39, 1
        %s694 = scalar_lea.sflag [#allocation10], %s693
        %s695 = sand.u32 %s137, 1
        %s696 = smul.addr %s695, 192
        %s697 = scalar_lea.vmem [#allocation9], %s696
        %p698 = pneg %p150
        %p699 = pneg %p147
        %p700 = scmp.lt.s32.totalorder %s44, 1
        %s701 = scalar_select %p700, %s44, 1
        %s702 = smul.addr %s701, 3
        %s703 = scalar_lea.vmem %s4, %s702
        %p704 = pneg %p176
        %p705 = pneg %p173
        %s706 = sand.u32 %s39, 1
        %s707 = scalar_lea.sflag [#allocation10], %s706
        %s708 = sand.u32 %s189, 1
        %s709 = smul.addr %s708, 64
        %s710 = scalar_lea.vmem [#allocation11], %s709
        %p711 = pneg %p202
        %p712 = pneg %p199
        %p713 = scmp.lt.s32.totalorder %s44, 1
        %s714 = scalar_select %p713, %s44, 1
        %s715 = scalar_lea.vmem %s6, %s714
        %p716 = pneg %p228
        %p717 = pneg %p225
        %p718 = scmp.lt.s32.totalorder %s44, 1
        %s719 = scalar_select %p718, %s44, 1
        %s720 = scalar_lea.vmem %s7, %s719
        %p721 = pneg %p254
        %p722 = pneg %p251
        %p723 = scmp.lt.s32.totalorder %s44, 1
        %s724 = scalar_select %p723, %s44, 1
        %s725 = scalar_lea.vmem %s8, %s724
        %p726 = pneg %p280
        %p727 = pneg %p277
        %s728 = sand.u32 %s39, 1
        %s729 = scalar_lea.sflag [#allocation13], %s728
        %s730 = sand.u32 %s293, 1
        %s731 = smul.addr %s730, 256
        %s732 = scalar_lea.vmem [#allocation12], %s731
        %p733 = pneg %p306
        %p734 = pneg %p303
        %p735 = scmp.lt.s32.totalorder %s44, 1
        %s736 = scalar_select %p735, %s44, 1
        %s737 = smul.addr %s736, 4
        %s738 = scalar_lea.vmem %s10, %s737
        %p739 = pneg %p332
        %p740 = pneg %p329
        %s741 = sand.u32 %s39, 1
        %s742 = scalar_lea.sflag [#allocation13], %s741
        %s743 = sand.u32 %s345, 1
        %s744 = smul.addr %s743, 256
        %s745 = scalar_lea.vmem [#allocation14], %s744
        %p746 = pneg %p358
        %p747 = pneg %p355
        %p748 = scmp.lt.s32.totalorder %s44, 1
        %s749 = scalar_select %p748, %s44, 1
        %s750 = scalar_lea.vmem %s12, %s749
        %p751 = pneg %p384
        %p752 = pneg %p381
        %p753 = pneg %p410
        %p754 = pneg %p407
        %s755 = sand.u32 %s397, 1
        %s756 = scalar_lea.sflag [#allocation5], %s755
        %s757 = sand.u32 %s397, 1
        %s758 = smul.addr %s757, 16
        %s759 = scalar_lea.vmem [#allocation15], %s758
        %p760 = scmp.lt.s32.totalorder %s44, 1
        %s761 = scalar_select %p760, %s44, 1
        %s762 = smul.addr %s761, 3
        %s763 = scalar_lea.vmem %s4, %s762
        %p764 = scmp.lt.s32.totalorder %s44, 1
        %s765 = scalar_select %p764, %s44, 1
        %s766 = scalar_lea.vmem %s6, %s765
        %p767 = scmp.lt.s32.totalorder %s44, 1
        %s768 = scalar_select %p767, %s44, 1
        %s769 = scalar_lea.vmem %s7, %s768
        %p770 = scmp.lt.s32.totalorder %s44, 1
        %s771 = scalar_select %p770, %s44, 1
        %s772 = scalar_lea.vmem %s8, %s771
        %p773 = scmp.lt.s32.totalorder %s44, 1
        %s774 = scalar_select %p773, %s44, 1
        %s775 = smul.addr %s774, 4
        %s776 = scalar_lea.vmem %s10, %s775
        %p777 = scmp.lt.s32.totalorder %s44, 1
        %s778 = scalar_select %p777, %s44, 1
        %s779 = scalar_lea.vmem %s12, %s778
        %p781 = scmp.eq.s32.totalorder %s44, 0
        // Predicated region
        $region101: #{tpu_custom_call.1} parent=71 // pred_check
          %p782 = pneg %p781
        $region102: #{tpu_custom_call.1} parent=71 // pred_check_branch
          %784 = sbr.rel (%p782) target = $region104
        $region103: #{tpu_custom_call.1} parent=71 // pred_region
          %v785 = vld [vmem:[%s617] sm:$0xff]
          %v786 = vld [vmem:[%s617 + $0x8] sm:$0xff]
          %787 = vst [vmem:[#allocation2] sm:$0xff] %v785
          %788 = vst [vmem:[#allocation2 + $0x8] sm:$0xff] %v786
        $region104: #{tpu_custom_call.1} parent=71 // pred_fallthru
          _
        %v789 = vld [vmem:[#allocation2] sm:$0xff]
        %v790 = vld [vmem:[#allocation2 + $0x8] sm:$0xff]
        %v791 = vld [vmem:[%s625] sm:$0x1]
        %v792 = vld [vmem:[%s633] sm:$0x1]
        %793 = vadd.xlane.f32.xlu0 %v789
        %v794 = vpop.xlane.xlu0 %793
        %795 = vadd.xlane.f32.xlu0 %v790
        %v796 = vpop.xlane.xlu0 %795
        %v797 = vrcp.pop 128.0
        %v798 = vmul.f32 %v794, %v797
        %v799 = vmul.f32 %v796, %v797
        %v800 = vsub.f32 %v789, %v798
        %v801 = vsub.f32 %v790, %v799
        %v802 = vmul.f32 %v800, %v800
        %v803 = vmul.f32 %v801, %v801
        %804 = vadd.xlane.f32.xlu0 %v802
        %v805 = vpop.xlane.xlu0 %804
        %806 = vadd.xlane.f32.xlu0 %v803
        %v807 = vpop.xlane.xlu0 %806
        %v808 = vmul.f32 %v805, %v797
        %v809 = vmul.f32 %v807, %v797
        %v810 = vadd.f32 %v808, 1e-05
        %v811 = vadd.f32 %v809, 1e-05
        %v812 = vrsqrt.pop %v810
        %v813 = vrsqrt.pop %v811
        %v814 = vmul.f32 %v800, %v812
        %v815 = vmul.f32 %v801, %v813
        %v817 = vlaneseq
        %v818 = vshrl.u32 %v817, 7
        %v819 = vsub.s32 0, %v818
        %v820 = vrot.slane %v791, %v819
        %v822 = vmul.f32 %v814, %v820
        %v823 = vmul.f32 %v815, %v820
        %v825 = vlaneseq
        %v826 = vshrl.u32 %v825, 7
        %v827 = vsub.s32 0, %v826
        %v828 = vrot.slane %v792, %v827
        %v830 = vadd.f32 %v822, %v828
        %v831 = vadd.f32 %v823, %v828
        %v832 = vpack.c.bf16 %v831, %v830
        %v833 = vld [vmem:[%s642] sm:$0xff]
        %v834 = vld [vmem:[%s642 + $0x8] sm:$0xf]
        %v835 = vld [vmem:[%s642 + $0xc] sm:$0xff]
        %v836 = vld [vmem:[%s642 + $0x14] sm:$0xf]
        %v837 = vld [vmem:[%s642 + $0x18] sm:$0xff]
        %v838 = vld [vmem:[%s642 + $0x20] sm:$0xf]
        %v839 = vld [vmem:[%s642 + $0x24] sm:$0xff]
        %v840 = vld [vmem:[%s642 + $0x2c] sm:$0xf]
        %v841 = vld [vmem:[%s642 + $0x30] sm:$0xff]
        %v842 = vld [vmem:[%s642 + $0x38] sm:$0xf]
        %v843 = vld [vmem:[%s642 + $0x3c] sm:$0xff]
        %v844 = vld [vmem:[%s642 + $0x44] sm:$0xf]
        %v845 = vld [vmem:[%s642 + $0x48] sm:$0xff]
        %v846 = vld [vmem:[%s642 + $0x50] sm:$0xf]
        %v847 = vld [vmem:[%s642 + $0x54] sm:$0xff]
        %v848 = vld [vmem:[%s642 + $0x5c] sm:$0xf]
        %v849 = vld [vmem:[%s642 + $0x60] sm:$0xff]
        %v850 = vld [vmem:[%s642 + $0x68] sm:$0xf]
        %v851 = vld [vmem:[%s642 + $0x6c] sm:$0xff]
        %v852 = vld [vmem:[%s642 + $0x74] sm:$0xf]
        %v853 = vld [vmem:[%s642 + $0x78] sm:$0xff]
        %v854 = vld [vmem:[%s642 + $0x80] sm:$0xf]
        %v855 = vld [vmem:[%s642 + $0x84] sm:$0xff]
        %v856 = vld [vmem:[%s642 + $0x8c] sm:$0xf]
        %v857 = vld [vmem:[%s642 + $0x90] sm:$0xff]
        %v858 = vld [vmem:[%s642 + $0x98] sm:$0xf]
        %v859 = vld [vmem:[%s642 + $0x9c] sm:$0xff]
        %v860 = vld [vmem:[%s642 + $0xa4] sm:$0xf]
        %v861 = vld [vmem:[%s642 + $0xa8] sm:$0xff]
        %v862 = vld [vmem:[%s642 + $0xb0] sm:$0xf]
        %v863 = vld [vmem:[%s642 + $0xb4] sm:$0xff]
        %v864 = vld [vmem:[%s642 + $0xbc] sm:$0xf]
        %v865 = vld [vmem:[%s763] sm:$0x7]
        %v867 = vlaneseq
        %v868 = vshrl.u32 %v867, 7
        %v869 = vsub.s32 0, %v868
        %v870 = vrot.slane %v865, %v869
        %v871 = vlaneseq
        %v872 = vshrl.u32 %v871, 7
        %v873 = vsub.s32 1, %v872
        %v874 = vrot.slane %v865, %v873
        %v875 = vlaneseq
        %v876 = vshrl.u32 %v875, 7
        %v877 = vsub.s32 2, %v876
        %v878 = vrot.slane %v865, %v877
        %v914 = vunpack.c.l.b16 %v833
        %v915 = vunpack.c.h.b16 %v833
        %v916 = vunpack.c.l.b16 %v834
        %v917 = vunpack.c.l.b16 %v835
        %v918 = vunpack.c.h.b16 %v835
        %v919 = vunpack.c.l.b16 %v836
        %v920 = vunpack.c.l.b16 %v837
        %v921 = vunpack.c.h.b16 %v837
        %v922 = vunpack.c.l.b16 %v838
        %v923 = vunpack.c.l.b16 %v839
        %v924 = vunpack.c.h.b16 %v839
        %v925 = vunpack.c.l.b16 %v840
        %v926 = vunpack.c.l.b16 %v841
        %v927 = vunpack.c.h.b16 %v841
        %v928 = vunpack.c.l.b16 %v842
        %v929 = vunpack.c.l.b16 %v843
        %v930 = vunpack.c.h.b16 %v843
        %v931 = vunpack.c.l.b16 %v844
        %v932 = vunpack.c.l.b16 %v845
        %v933 = vunpack.c.h.b16 %v845
        %v934 = vunpack.c.l.b16 %v846
        %v935 = vunpack.c.l.b16 %v847
        %v936 = vunpack.c.h.b16 %v847
        %v937 = vunpack.c.l.b16 %v848
        %v938 = vunpack.c.l.b16 %v849
        %v939 = vunpack.c.h.b16 %v849
        %v940 = vunpack.c.l.b16 %v850
        %v941 = vunpack.c.l.b16 %v851
        %v942 = vunpack.c.h.b16 %v851
        %v943 = vunpack.c.l.b16 %v852
        %v944 = vunpack.c.l.b16 %v853
        %v945 = vunpack.c.h.b16 %v853
        %v946 = vunpack.c.l.b16 %v854
        %v947 = vunpack.c.l.b16 %v855
        %v948 = vunpack.c.h.b16 %v855
        %v949 = vunpack.c.l.b16 %v856
        %v950 = vunpack.c.l.b16 %v857
        %v951 = vunpack.c.h.b16 %v857
        %v952 = vunpack.c.l.b16 %v858
        %v953 = vunpack.c.l.b16 %v859
        %v954 = vunpack.c.h.b16 %v859
        %v955 = vunpack.c.l.b16 %v860
        %v956 = vunpack.c.l.b16 %v861
        %v957 = vunpack.c.h.b16 %v861
        %v958 = vunpack.c.l.b16 %v862
        %v959 = vunpack.c.l.b16 %v863
        %v960 = vunpack.c.h.b16 %v863
        %v961 = vunpack.c.l.b16 %v864
        %v962 = vpack.c.b16 %v917, %v914
        %v963 = vpack.c.b16 %v918, %v915
        %v964 = vpack.c.b16 %v919, %v916
        %v965 = vpack.c.b16 %v923, %v920
        %v966 = vpack.c.b16 %v924, %v921
        %v967 = vpack.c.b16 %v925, %v922
        %v968 = vpack.c.b16 %v929, %v926
        %v969 = vpack.c.b16 %v930, %v927
        %v970 = vpack.c.b16 %v931, %v928
        %v971 = vpack.c.b16 %v935, %v932
        %v972 = vpack.c.b16 %v936, %v933
        %v973 = vpack.c.b16 %v937, %v934
        %v974 = vpack.c.b16 %v941, %v938
        %v975 = vpack.c.b16 %v942, %v939
        %v976 = vpack.c.b16 %v943, %v940
        %v977 = vpack.c.b16 %v947, %v944
        %v978 = vpack.c.b16 %v948, %v945
        %v979 = vpack.c.b16 %v949, %v946
        %v980 = vpack.c.b16 %v953, %v950
        %v981 = vpack.c.b16 %v954, %v951
        %v982 = vpack.c.b16 %v955, %v952
        %v983 = vpack.c.b16 %v959, %v956
        %v984 = vpack.c.b16 %v960, %v957
        %v985 = vpack.c.b16 %v961, %v958
        %1010 = vmatprep.subr.bf16.mxu0 %v963
        %1011 = vmatpush1.bf16.msra.mxu0 %v962
        %1012 = vmatprep.subr.bf16.mxu0 %v966
        %1013 = vmatpush1.bf16.msra.mxu0 %v965
        %1014 = vmatprep.subr.bf16.mxu0 %v969
        %1015 = vmatpush1.bf16.msra.mxu0 %v968
        %1016 = vmatprep.subr.bf16.mxu0 %v972
        %1017 = vmatpush1.bf16.msra.mxu0 %v971
        %1018 = vmatprep.subr.bf16.mxu0 %v975
        %1019 = vmatpush1.bf16.msra.mxu0 %v974
        %1020 = vmatprep.subr.bf16.mxu0 %v978
        %1021 = vmatpush1.bf16.msra.mxu0 %v977
        %1022 = vmatprep.subr.bf16.mxu0 %v981
        %1023 = vmatpush1.bf16.msra.mxu0 %v980
        %1024 = vmatprep.subr.bf16.mxu0 %v984
        %1025 = vmatpush1.bf16.msra.mxu0 %v983
        %1026 = vmatprep.subr.bf16.mxu0 0
        %1027 = vmatpush1.bf16.msra.mxu0 0
        %1028 = vmatprep.subr.bf16.mxu0 0
        %1029 = vmatpush1.bf16.msra.mxu0 0
        %1030 = vmatprep.subr.bf16.mxu0 0
        %1031 = vmatpush1.bf16.msra.mxu0 0
        %1032 = vmatprep.subr.bf16.mxu0 0
        %1033 = vmatpush1.bf16.msra.mxu0 0
        %1034 = vmatprep.subr.bf16.mxu0 0
        %1035 = vmatpush1.bf16.msra.mxu0 0
        %1036 = vmatprep.subr.bf16.mxu0 0
        %1037 = vmatpush1.bf16.msra.mxu0 0
        %1038 = vmatprep.subr.bf16.mxu0 0
        %1039 = vmatpush1.bf16.msra.mxu0 0
        %1040 = vmatprep.subr.bf16.mxu0 0
        %1041 = vmatpush1.bf16.msra.mxu0 0
        %1042 = vmatprep.mubr.bf16.mxu0 0
        %1043 = vmatmul.mubr.bf16.gmra.mrb[0].mxu0 %v832
        %v1044 = vpop.f32.mrb[0].mxu0
        %v1045 = vadd.f32 %v870, %v1044
        %v1046 = vpop.f32.mrb[0].mxu0
        %v1047 = vadd.f32 %v874, %v1046
        %v1048 = vpop.f32.mrb[0].mxu0
        %v1049 = vadd.f32 %v870, %v1048
        %v1050 = vpop.f32.mrb[0].mxu0
        %v1051 = vadd.f32 %v874, %v1050
        %1052 = vdwg.mxu0
        %1053 = vmatprep.subr.bf16.mxu0 0
        %1054 = vmatpush1.bf16.msra.mxu0 %v964
        %1055 = vmatprep.subr.bf16.mxu0 0
        %1056 = vmatpush1.bf16.msra.mxu0 %v967
        %1057 = vmatprep.subr.bf16.mxu0 0
        %1058 = vmatpush1.bf16.msra.mxu0 %v970
        %1059 = vmatprep.subr.bf16.mxu0 0
        %1060 = vmatpush1.bf16.msra.mxu0 %v973
        %1061 = vmatprep.subr.bf16.mxu0 0
        %1062 = vmatpush1.bf16.msra.mxu0 %v976
        %1063 = vmatprep.subr.bf16.mxu0 0
        %1064 = vmatpush1.bf16.msra.mxu0 %v979
        %1065 = vmatprep.subr.bf16.mxu0 0
        %1066 = vmatpush1.bf16.msra.mxu0 %v982
        %1067 = vmatprep.subr.bf16.mxu0 0
        %1068 = vmatpush1.bf16.msra.mxu0 %v985
        %1069 = vmatprep.subr.bf16.mxu0 0
        %1070 = vmatpush1.bf16.msra.mxu0 0
        %1071 = vmatprep.subr.bf16.mxu0 0
        %1072 = vmatpush1.bf16.msra.mxu0 0
        %1073 = vmatprep.subr.bf16.mxu0 0
        %1074 = vmatpush1.bf16.msra.mxu0 0
        %1075 = vmatprep.subr.bf16.mxu0 0
        %1076 = vmatpush1.bf16.msra.mxu0 0
        %1077 = vmatprep.subr.bf16.mxu0 0
        %1078 = vmatpush1.bf16.msra.mxu0 0
        %1079 = vmatprep.subr.bf16.mxu0 0
        %1080 = vmatpush1.bf16.msra.mxu0 0
        %1081 = vmatprep.subr.bf16.mxu0 0
        %1082 = vmatpush1.bf16.msra.mxu0 0
        %1083 = vmatprep.subr.bf16.mxu0 0
        %1084 = vmatpush1.bf16.msra.mxu0 0
        %1085 = vmatprep.mubr.bf16.mxu0 0
        %1086 = vmatmul.mubr.bf16.gmra.mrb[0].mxu0 %v832
        %v1087 = vpop.f32.mrb[0].mxu0
        %v1088 = vadd.f32 %v878, %v1087
        %v1089 = vpop.f32.mrb[0].mxu0
        %v1090 = vpop.f32.mrb[0].mxu0
        %v1091 = vadd.f32 %v878, %v1090
        %v1092 = vpop.f32.mrb[0].mxu0
        %1093 = vdwg.mxu0
        %v1094 = vmul.f32 %v1045, 0.17677669
        %v1095 = vmul.f32 %v1049, 0.17677669
        %1098 = vrot.lane.b32.xlu0 %v1094, 96
        %v1099 = vpop.permute.xlu0 %1098
        %1100 = vrot.lane.b32.xlu0 %v1095, 96
        %v1101 = vpop.permute.xlu0 %1100
        %1104 = vrot.lane.b32.xlu0 %v1094, 64
        %v1105 = vpop.permute.xlu0 %1104
        %1106 = vrot.lane.b32.xlu0 %v1095, 64
        %v1107 = vpop.permute.xlu0 %1106
        %1110 = vrot.lane.b32.xlu0 %v1094, 32
        %v1111 = vpop.permute.xlu0 %1110
        %1112 = vrot.lane.b32.xlu0 %v1095, 32
        %v1113 = vpop.permute.xlu0 %1112
        %1118 = vrot.lane.b32.xlu0 %v1047, 96
        %v1119 = vpop.permute.xlu0 %1118
        %1120 = vrot.lane.b32.xlu0 %v1051, 96
        %v1121 = vpop.permute.xlu0 %1120
        %1124 = vrot.lane.b32.xlu0 %v1047, 64
        %v1125 = vpop.permute.xlu0 %1124
        %1126 = vrot.lane.b32.xlu0 %v1051, 64
        %v1127 = vpop.permute.xlu0 %1126
        %1130 = vrot.lane.b32.xlu0 %v1047, 32
        %v1131 = vpop.permute.xlu0 %1130
        %1132 = vrot.lane.b32.xlu0 %v1051, 32
        %v1133 = vpop.permute.xlu0 %1132
        %1138 = vrot.lane.b32.xlu0 %v1088, 96
        %v1139 = vpop.permute.xlu0 %1138
        %1140 = vrot.lane.b32.xlu0 %v1091, 96
        %v1141 = vpop.permute.xlu0 %1140
        %1144 = vrot.lane.b32.xlu0 %v1088, 64
        %v1145 = vpop.permute.xlu0 %1144
        %1146 = vrot.lane.b32.xlu0 %v1091, 64
        %v1147 = vpop.permute.xlu0 %1146
        %1150 = vrot.lane.b32.xlu0 %v1088, 32
        %v1151 = vpop.permute.xlu0 %1150
        %1152 = vrot.lane.b32.xlu0 %v1091, 32
        %v1153 = vpop.permute.xlu0 %1152
        %v1156 = vpack.c.bf16 %v1095, %v1094
        %v1157 = vpack.c.bf16 %v1101, %v1099
        %v1158 = vpack.c.bf16 %v1107, %v1105
        %v1159 = vpack.c.bf16 %v1113, %v1111
        %v1160 = vpack.c.bf16 %v1051, %v1047
        %v1161 = vpack.c.bf16 %v1121, %v1119
        %v1162 = vpack.c.bf16 %v1127, %v1125
        %v1163 = vpack.c.bf16 %v1133, %v1131
        %vm1164 = vcmask 261120
        %v1166 = vsel %vm1164, %v1156, 0
        %v1169 = vsel %vm1164, %v1160, 0
        %1171 = vmatprep.subr.bf16.mxu0 0
        %1172 = vmatpush1.bf16.xpose.msra.mxu0 %v1169
        %1173 = vmatprep.subr.bf16.mxu0 0
        %1174 = vmatpush1.bf16.xpose.msra.mxu0 0
        %1175 = vmatprep.subr.bf16.mxu0 0
        %1176 = vmatpush1.bf16.xpose.msra.mxu0 0
        %1177 = vmatprep.subr.bf16.mxu0 0
        %1178 = vmatpush1.bf16.xpose.msra.mxu0 0
        %1179 = vmatprep.subr.bf16.mxu0 0
        %1180 = vmatpush1.bf16.xpose.msra.mxu0 0
        %1181 = vmatprep.subr.bf16.mxu0 0
        %1182 = vmatpush1.bf16.xpose.msra.mxu0 0
        %1183 = vmatprep.subr.bf16.mxu0 0
        %1184 = vmatpush1.bf16.xpose.msra.mxu0 0
        %1185 = vmatprep.subr.bf16.mxu0 0
        %1186 = vmatpush1.bf16.xpose.msra.mxu0 0
        %1187 = vmatprep.subr.bf16.mxu0 0
        %1188 = vmatpush1.bf16.xpose.msra.mxu0 0
        %1189 = vmatprep.subr.bf16.mxu0 0
        %1190 = vmatpush1.bf16.xpose.msra.mxu0 0
        %1191 = vmatprep.subr.bf16.mxu0 0
        %1192 = vmatpush1.bf16.xpose.msra.mxu0 0
        %1193 = vmatprep.subr.bf16.mxu0 0
        %1194 = vmatpush1.bf16.xpose.msra.mxu0 0
        %1195 = vmatprep.subr.bf16.mxu0 0
        %1196 = vmatpush1.bf16.xpose.msra.mxu0 0
        %1197 = vmatprep.subr.bf16.mxu0 0
        %1198 = vmatpush1.bf16.xpose.msra.mxu0 0
        %1199 = vmatprep.subr.bf16.mxu0 0
        %1200 = vmatpush1.bf16.xpose.msra.mxu0 0
        %1201 = vmatprep.subr.bf16.mxu0 0
        %1202 = vmatpush1.bf16.xpose.msra.mxu0 0
        %1203 = vmatprep.mubr.bf16.mxu0 0
        %1204 = vmatmul.mubr.bf16.gmra.mrb[0].mxu0 %v1166
        %v1205 = vpop.f32.mrb[0].mxu0
        %v1206 = vadd.f32 0.0, %v1205
        %v1207 = vpop.f32.mrb[0].mxu0
        %v1208 = vpop.f32.mrb[0].mxu0
        %v1209 = vadd.f32 0.0, %v1208
        %v1210 = vpop.f32.mrb[0].mxu0
        %1211 = vdwg.mxu0
        %v1213 = vsel %vm1164, %v1157, 0
        %v1216 = vsel %vm1164, %v1161, 0
        %1218 = vmatprep.subr.bf16.mxu0 0
        %1219 = vmatpush1.bf16.xpose.msra.mxu0 %v1216
        %1220 = vmatprep.subr.bf16.mxu0 0
        %1221 = vmatpush1.bf16.xpose.msra.mxu0 0
        %1222 = vmatprep.subr.bf16.mxu0 0
        %1223 = vmatpush1.bf16.xpose.msra.mxu0 0
        %1224 = vmatprep.subr.bf16.mxu0 0
        %1225 = vmatpush1.bf16.xpose.msra.mxu0 0
        %1226 = vmatprep.subr.bf16.mxu0 0
        %1227 = vmatpush1.bf16.xpose.msra.mxu0 0
        %1228 = vmatprep.subr.bf16.mxu0 0
        %1229 = vmatpush1.bf16.xpose.msra.mxu0 0
        %1230 = vmatprep.subr.bf16.mxu0 0
        %1231 = vmatpush1.bf16.xpose.msra.mxu0 0
        %1232 = vmatprep.subr.bf16.mxu0 0
        %1233 = vmatpush1.bf16.xpose.msra.mxu0 0
        %1234 = vmatprep.subr.bf16.mxu0 0
        %1235 = vmatpush1.bf16.xpose.msra.mxu0 0
        %1236 = vmatprep.subr.bf16.mxu0 0
        %1237 = vmatpush1.bf16.xpose.msra.mxu0 0
        %1238 = vmatprep.subr.bf16.mxu0 0
        %1239 = vmatpush1.bf16.xpose.msra.mxu0 0
        %1240 = vmatprep.subr.bf16.mxu0 0
        %1241 = vmatpush1.bf16.xpose.msra.mxu0 0
        %1242 = vmatprep.subr.bf16.mxu0 0
        %1243 = vmatpush1.bf16.xpose.msra.mxu0 0
        %1244 = vmatprep.subr.bf16.mxu0 0
        %1245 = vmatpush1.bf16.xpose.msra.mxu0 0
        %1246 = vmatprep.subr.bf16.mxu0 0
        %1247 = vmatpush1.bf16.xpose.msra.mxu0 0
        %1248 = vmatprep.subr.bf16.mxu0 0
        %1249 = vmatpush1.bf16.xpose.msra.mxu0 0
        %1250 = vmatprep.mubr.bf16.mxu0 0
        %1251 = vmatmul.mubr.bf16.gmra.mrb[0].mxu0 %v1213
        %v1252 = vpop.f32.mrb[0].mxu0
        %v1253 = vadd.f32 0.0, %v1252
        %v1254 = vpop.f32.mrb[0].mxu0
        %v1255 = vpop.f32.mrb[0].mxu0
        %v1256 = vadd.f32 0.0, %v1255
        %v1257 = vpop.f32.mrb[0].mxu0
        %1258 = vdwg.mxu0
        %v1260 = vsel %vm1164, %v1158, 0
        %v1263 = vsel %vm1164, %v1162, 0
        %1265 = vmatprep.subr.bf16.mxu0 0
        %1266 = vmatpush1.bf16.xpose.msra.mxu0 %v1263
        %1267 = vmatprep.subr.bf16.mxu0 0
        %1268 = vmatpush1.bf16.xpose.msra.mxu0 0
        %1269 = vmatprep.subr.bf16.mxu0 0
        %1270 = vmatpush1.bf16.xpose.msra.mxu0 0
        %1271 = vmatprep.subr.bf16.mxu0 0
        %1272 = vmatpush1.bf16.xpose.msra.mxu0 0
        %1273 = vmatprep.subr.bf16.mxu0 0
        %1274 = vmatpush1.bf16.xpose.msra.mxu0 0
        %1275 = vmatprep.subr.bf16.mxu0 0
        %1276 = vmatpush1.bf16.xpose.msra.mxu0 0
        %1277 = vmatprep.subr.bf16.mxu0 0
        %1278 = vmatpush1.bf16.xpose.msra.mxu0 0
        %1279 = vmatprep.subr.bf16.mxu0 0
        %1280 = vmatpush1.bf16.xpose.msra.mxu0 0
        %1281 = vmatprep.subr.bf16.mxu0 0
        %1282 = vmatpush1.bf16.xpose.msra.mxu0 0
        %1283 = vmatprep.subr.bf16.mxu0 0
        %1284 = vmatpush1.bf16.xpose.msra.mxu0 0
        %1285 = vmatprep.subr.bf16.mxu0 0
        %1286 = vmatpush1.bf16.xpose.msra.mxu0 0
        %1287 = vmatprep.subr.bf16.mxu0 0
        %1288 = vmatpush1.bf16.xpose.msra.mxu0 0
        %1289 = vmatprep.subr.bf16.mxu0 0
        %1290 = vmatpush1.bf16.xpose.msra.mxu0 0
        %1291 = vmatprep.subr.bf16.mxu0 0
        %1292 = vmatpush1.bf16.xpose.msra.mxu0 0
        %1293 = vmatprep.subr.bf16.mxu0 0
        %1294 = vmatpush1.bf16.xpose.msra.mxu0 0
        %1295 = vmatprep.subr.bf16.mxu0 0
        %1296 = vmatpush1.bf16.xpose.msra.mxu0 0
        %1297 = vmatprep.mubr.bf16.mxu0 0
        %1298 = vmatmul.mubr.bf16.gmra.mrb[0].mxu0 %v1260
        %v1299 = vpop.f32.mrb[0].mxu0
        %v1300 = vadd.f32 0.0, %v1299
        %v1301 = vpop.f32.mrb[0].mxu0
        %v1302 = vpop.f32.mrb[0].mxu0
        %v1303 = vadd.f32 0.0, %v1302
        %v1304 = vpop.f32.mrb[0].mxu0
        %1305 = vdwg.mxu0
        %v1307 = vsel %vm1164, %v1159, 0
        %v1310 = vsel %vm1164, %v1163, 0
        %1312 = vmatprep.subr.bf16.mxu0 0
        %1313 = vmatpush1.bf16.xpose.msra.mxu0 %v1310
        %1314 = vmatprep.subr.bf16.mxu0 0
        %1315 = vmatpush1.bf16.xpose.msra.mxu0 0
        %1316 = vmatprep.subr.bf16.mxu0 0
        %1317 = vmatpush1.bf16.xpose.msra.mxu0 0
        %1318 = vmatprep.subr.bf16.mxu0 0
        %1319 = vmatpush1.bf16.xpose.msra.mxu0 0
        %1320 = vmatprep.subr.bf16.mxu0 0
        %1321 = vmatpush1.bf16.xpose.msra.mxu0 0
        %1322 = vmatprep.subr.bf16.mxu0 0
        %1323 = vmatpush1.bf16.xpose.msra.mxu0 0
        %1324 = vmatprep.subr.bf16.mxu0 0
        %1325 = vmatpush1.bf16.xpose.msra.mxu0 0
        %1326 = vmatprep.subr.bf16.mxu0 0
        %1327 = vmatpush1.bf16.xpose.msra.mxu0 0
        %1328 = vmatprep.subr.bf16.mxu0 0
        %1329 = vmatpush1.bf16.xpose.msra.mxu0 0
        %1330 = vmatprep.subr.bf16.mxu0 0
        %1331 = vmatpush1.bf16.xpose.msra.mxu0 0
        %1332 = vmatprep.subr.bf16.mxu0 0
        %1333 = vmatpush1.bf16.xpose.msra.mxu0 0
        %1334 = vmatprep.subr.bf16.mxu0 0
        %1335 = vmatpush1.bf16.xpose.msra.mxu0 0
        %1336 = vmatprep.subr.bf16.mxu0 0
        %1337 = vmatpush1.bf16.xpose.msra.mxu0 0
        %1338 = vmatprep.subr.bf16.mxu0 0
        %1339 = vmatpush1.bf16.xpose.msra.mxu0 0
        %1340 = vmatprep.subr.bf16.mxu0 0
        %1341 = vmatpush1.bf16.xpose.msra.mxu0 0
        %1342 = vmatprep.subr.bf16.mxu0 0
        %1343 = vmatpush1.bf16.xpose.msra.mxu0 0
        %1344 = vmatprep.mubr.bf16.mxu0 0
        %1345 = vmatmul.mubr.bf16.gmra.mrb[0].mxu0 %v1307
        %v1346 = vpop.f32.mrb[0].mxu0
        %v1347 = vadd.f32 0.0, %v1346
        %v1348 = vpop.f32.mrb[0].mxu0
        %v1349 = vpop.f32.mrb[0].mxu0
        %v1350 = vadd.f32 0.0, %v1349
        %v1351 = vpop.f32.mrb[0].mxu0
        %1352 = vdwg.mxu0
        %vm1353 = vcmask 130048
        %v1354 = vsel %vm1353, %v1206, -inf
        %1355 = vmax.xlane.f32.xlu0 %v1354
        %v1356 = vpop.xlane.xlu0 %1355
        %v1357 = vsel %vm1353, %v1209, -inf
        %1358 = vmax.xlane.f32.xlu0 %v1357
        %v1359 = vpop.xlane.xlu0 %1358
        %v1360 = vsel %vm1353, %v1253, -inf
        %1361 = vmax.xlane.f32.xlu0 %v1360
        %v1362 = vpop.xlane.xlu0 %1361
        %v1363 = vsel %vm1353, %v1256, -inf
        %1364 = vmax.xlane.f32.xlu0 %v1363
        %v1365 = vpop.xlane.xlu0 %1364
        %v1366 = vsel %vm1353, %v1300, -inf
        %1367 = vmax.xlane.f32.xlu0 %v1366
        %v1368 = vpop.xlane.xlu0 %1367
        %v1369 = vsel %vm1353, %v1303, -inf
        %1370 = vmax.xlane.f32.xlu0 %v1369
        %v1371 = vpop.xlane.xlu0 %1370
        %v1372 = vsel %vm1353, %v1347, -inf
        %1373 = vmax.xlane.f32.xlu0 %v1372
        %v1374 = vpop.xlane.xlu0 %1373
        %v1375 = vsel %vm1353, %v1350, -inf
        %1376 = vmax.xlane.f32.xlu0 %v1375
        %v1377 = vpop.xlane.xlu0 %1376
        %v1378 = vsub.f32 %v1206, %v1356
        %v1379 = vsub.f32 %v1209, %v1359
        %v1380 = vsub.f32 %v1253, %v1362
        %v1381 = vsub.f32 %v1256, %v1365
        %v1382 = vsub.f32 %v1300, %v1368
        %v1383 = vsub.f32 %v1303, %v1371
        %v1384 = vsub.f32 %v1347, %v1374
        %v1385 = vsub.f32 %v1350, %v1377
        %v1386 = vmul.f32 %v1378, 1.442695
        %v1387 = vpow.pop %v1386
        %v1388 = vmul.f32 %v1379, 1.442695
        %v1389 = vpow.pop %v1388
        %v1390 = vmul.f32 %v1380, 1.442695
        %v1391 = vpow.pop %v1390
        %v1392 = vmul.f32 %v1381, 1.442695
        %v1393 = vpow.pop %v1392
        %v1394 = vmul.f32 %v1382, 1.442695
        %v1395 = vpow.pop %v1394
        %v1396 = vmul.f32 %v1383, 1.442695
        %v1397 = vpow.pop %v1396
        %v1398 = vmul.f32 %v1384, 1.442695
        %v1399 = vpow.pop %v1398
        %v1400 = vmul.f32 %v1385, 1.442695
        %v1401 = vpow.pop %v1400
        %v1402 = vsel %vm1353, %v1387, 0.0
        %1403 = vadd.xlane.f32.xlu0 %v1402
        %v1404 = vpop.xlane.xlu0 %1403
        %v1405 = vsel %vm1353, %v1389, 0.0
        %1406 = vadd.xlane.f32.xlu0 %v1405
        %v1407 = vpop.xlane.xlu0 %1406
        %v1408 = vsel %vm1353, %v1391, 0.0
        %1409 = vadd.xlane.f32.xlu0 %v1408
        %v1410 = vpop.xlane.xlu0 %1409
        %v1411 = vsel %vm1353, %v1393, 0.0
        %1412 = vadd.xlane.f32.xlu0 %v1411
        %v1413 = vpop.xlane.xlu0 %1412
        %v1414 = vsel %vm1353, %v1395, 0.0
        %1415 = vadd.xlane.f32.xlu0 %v1414
        %v1416 = vpop.xlane.xlu0 %1415
        %v1417 = vsel %vm1353, %v1397, 0.0
        %1418 = vadd.xlane.f32.xlu0 %v1417
        %v1419 = vpop.xlane.xlu0 %1418
        %v1420 = vsel %vm1353, %v1399, 0.0
        %1421 = vadd.xlane.f32.xlu0 %v1420
        %v1422 = vpop.xlane.xlu0 %1421
        %v1423 = vsel %vm1353, %v1401, 0.0
        %1424 = vadd.xlane.f32.xlu0 %v1423
        %v1425 = vpop.xlane.xlu0 %1424
        %v1426 = vrcp.pop %v1404
        %v1427 = vrcp.pop %v1407
        %v1428 = vrcp.pop %v1410
        %v1429 = vrcp.pop %v1413
        %v1430 = vrcp.pop %v1416
        %v1431 = vrcp.pop %v1419
        %v1432 = vrcp.pop %v1422
        %v1433 = vrcp.pop %v1425
        %v1434 = vmul.f32 %v1387, %v1426
        %v1435 = vmul.f32 %v1389, %v1427
        %v1436 = vmul.f32 %v1391, %v1428
        %v1437 = vmul.f32 %v1393, %v1429
        %v1438 = vmul.f32 %v1395, %v1430
        %v1439 = vmul.f32 %v1397, %v1431
        %v1440 = vmul.f32 %v1399, %v1432
        %v1441 = vmul.f32 %v1401, %v1433
        %v1442 = vpack.c.bf16 %v1435, %v1434
        %v1443 = vpack.c.bf16 %v1437, %v1436
        %v1444 = vpack.c.bf16 %v1439, %v1438
        %v1445 = vpack.c.bf16 %v1441, %v1440
        %v1446 = vpack.c.bf16 %v1091, %v1088
        %v1447 = vpack.c.bf16 %v1141, %v1139
        %v1448 = vpack.c.bf16 %v1147, %v1145
        %v1449 = vpack.c.bf16 %v1153, %v1151
        %v1451 = vsel %vm1353, %v1442, 0
        %1453 = vmatprep.subr.bf16.mxu0 0
        %1454 = vmatpush1.bf16.msra.mxu0 %v1446
        %1455 = vmatprep.subr.bf16.mxu0 0
        %1456 = vmatpush1.bf16.msra.mxu0 0
        %1457 = vmatprep.subr.bf16.mxu0 0
        %1458 = vmatpush1.bf16.msra.mxu0 0
        %1459 = vmatprep.subr.bf16.mxu0 0
        %1460 = vmatpush1.bf16.msra.mxu0 0
        %1461 = vmatprep.subr.bf16.mxu0 0
        %1462 = vmatpush1.bf16.msra.mxu0 0
        %1463 = vmatprep.subr.bf16.mxu0 0
        %1464 = vmatpush1.bf16.msra.mxu0 0
        %1465 = vmatprep.subr.bf16.mxu0 0
        %1466 = vmatpush1.bf16.msra.mxu0 0
        %1467 = vmatprep.subr.bf16.mxu0 0
        %1468 = vmatpush1.bf16.msra.mxu0 0
        %1469 = vmatprep.subr.bf16.mxu0 0
        %1470 = vmatpush1.bf16.msra.mxu0 0
        %1471 = vmatprep.subr.bf16.mxu0 0
        %1472 = vmatpush1.bf16.msra.mxu0 0
        %1473 = vmatprep.subr.bf16.mxu0 0
        %1474 = vmatpush1.bf16.msra.mxu0 0
        %1475 = vmatprep.subr.bf16.mxu0 0
        %1476 = vmatpush1.bf16.msra.mxu0 0
        %1477 = vmatprep.subr.bf16.mxu0 0
        %1478 = vmatpush1.bf16.msra.mxu0 0
        %1479 = vmatprep.subr.bf16.mxu0 0
        %1480 = vmatpush1.bf16.msra.mxu0 0
        %1481 = vmatprep.subr.bf16.mxu0 0
        %1482 = vmatpush1.bf16.msra.mxu0 0
        %1483 = vmatprep.subr.bf16.mxu0 0
        %1484 = vmatpush1.bf16.msra.mxu0 0
        %1485 = vmatprep.mubr.bf16.mxu0 0
        %1486 = vmatmul.mubr.bf16.gmra.mrb[0].mxu0 %v1451
        %v1487 = vpop.f32.mrb[0].mxu0
        %v1488 = vadd.f32 0.0, %v1487
        %v1489 = vpop.f32.mrb[0].mxu0
        %v1490 = vpop.f32.mrb[0].mxu0
        %v1491 = vadd.f32 0.0, %v1490
        %v1492 = vpop.f32.mrb[0].mxu0
        %1493 = vdwg.mxu0
        %v1495 = vsel %vm1353, %v1443, 0
        %1497 = vmatprep.subr.bf16.mxu0 0
        %1498 = vmatpush1.bf16.msra.mxu0 %v1447
        %1499 = vmatprep.subr.bf16.mxu0 0
        %1500 = vmatpush1.bf16.msra.mxu0 0
        %1501 = vmatprep.subr.bf16.mxu0 0
        %1502 = vmatpush1.bf16.msra.mxu0 0
        %1503 = vmatprep.subr.bf16.mxu0 0
        %1504 = vmatpush1.bf16.msra.mxu0 0
        %1505 = vmatprep.subr.bf16.mxu0 0
        %1506 = vmatpush1.bf16.msra.mxu0 0
        %1507 = vmatprep.subr.bf16.mxu0 0
        %1508 = vmatpush1.bf16.msra.mxu0 0
        %1509 = vmatprep.subr.bf16.mxu0 0
        %1510 = vmatpush1.bf16.msra.mxu0 0
        %1511 = vmatprep.subr.bf16.mxu0 0
        %1512 = vmatpush1.bf16.msra.mxu0 0
        %1513 = vmatprep.subr.bf16.mxu0 0
        %1514 = vmatpush1.bf16.msra.mxu0 0
        %1515 = vmatprep.subr.bf16.mxu0 0
        %1516 = vmatpush1.bf16.msra.mxu0 0
        %1517 = vmatprep.subr.bf16.mxu0 0
        %1518 = vmatpush1.bf16.msra.mxu0 0
        %1519 = vmatprep.subr.bf16.mxu0 0
        %1520 = vmatpush1.bf16.msra.mxu0 0
        %1521 = vmatprep.subr.bf16.mxu0 0
        %1522 = vmatpush1.bf16.msra.mxu0 0
        %1523 = vmatprep.subr.bf16.mxu0 0
        %1524 = vmatpush1.bf16.msra.mxu0 0
        %1525 = vmatprep.subr.bf16.mxu0 0
        %1526 = vmatpush1.bf16.msra.mxu0 0
        %1527 = vmatprep.subr.bf16.mxu0 0
        %1528 = vmatpush1.bf16.msra.mxu0 0
        %1529 = vmatprep.mubr.bf16.mxu0 0
        %1530 = vmatmul.mubr.bf16.gmra.mrb[0].mxu0 %v1495
        %v1531 = vpop.f32.mrb[0].mxu0
        %v1532 = vadd.f32 0.0, %v1531
        %v1533 = vpop.f32.mrb[0].mxu0
        %v1534 = vpop.f32.mrb[0].mxu0
        %v1535 = vadd.f32 0.0, %v1534
        %v1536 = vpop.f32.mrb[0].mxu0
        %1537 = vdwg.mxu0
        %v1539 = vsel %vm1353, %v1444, 0
        %1541 = vmatprep.subr.bf16.mxu0 0
        %1542 = vmatpush1.bf16.msra.mxu0 %v1448
        %1543 = vmatprep.subr.bf16.mxu0 0
        %1544 = vmatpush1.bf16.msra.mxu0 0
        %1545 = vmatprep.subr.bf16.mxu0 0
        %1546 = vmatpush1.bf16.msra.mxu0 0
        %1547 = vmatprep.subr.bf16.mxu0 0
        %1548 = vmatpush1.bf16.msra.mxu0 0
        %1549 = vmatprep.subr.bf16.mxu0 0
        %1550 = vmatpush1.bf16.msra.mxu0 0
        %1551 = vmatprep.subr.bf16.mxu0 0
        %1552 = vmatpush1.bf16.msra.mxu0 0
        %1553 = vmatprep.subr.bf16.mxu0 0
        %1554 = vmatpush1.bf16.msra.mxu0 0
        %1555 = vmatprep.subr.bf16.mxu0 0
        %1556 = vmatpush1.bf16.msra.mxu0 0
        %1557 = vmatprep.subr.bf16.mxu0 0
        %1558 = vmatpush1.bf16.msra.mxu0 0
        %1559 = vmatprep.subr.bf16.mxu0 0
        %1560 = vmatpush1.bf16.msra.mxu0 0
        %1561 = vmatprep.subr.bf16.mxu0 0
        %1562 = vmatpush1.bf16.msra.mxu0 0
        %1563 = vmatprep.subr.bf16.mxu0 0
        %1564 = vmatpush1.bf16.msra.mxu0 0
        %1565 = vmatprep.subr.bf16.mxu0 0
        %1566 = vmatpush1.bf16.msra.mxu0 0
        %1567 = vmatprep.subr.bf16.mxu0 0
        %1568 = vmatpush1.bf16.msra.mxu0 0
        %1569 = vmatprep.subr.bf16.mxu0 0
        %1570 = vmatpush1.bf16.msra.mxu0 0
        %1571 = vmatprep.subr.bf16.mxu0 0
        %1572 = vmatpush1.bf16.msra.mxu0 0
        %1573 = vmatprep.mubr.bf16.mxu0 0
        %1574 = vmatmul.mubr.bf16.gmra.mrb[0].mxu0 %v1539
        %v1575 = vpop.f32.mrb[0].mxu0
        %v1576 = vadd.f32 0.0, %v1575
        %v1577 = vpop.f32.mrb[0].mxu0
        %v1578 = vpop.f32.mrb[0].mxu0
        %v1579 = vadd.f32 0.0, %v1578
        %v1580 = vpop.f32.mrb[0].mxu0
        %1581 = vdwg.mxu0
        %v1583 = vsel %vm1353, %v1445, 0
        %1585 = vmatprep.subr.bf16.mxu0 0
        %1586 = vmatpush1.bf16.msra.mxu0 %v1449
        %1587 = vmatprep.subr.bf16.mxu0 0
        %1588 = vmatpush1.bf16.msra.mxu0 0
        %1589 = vmatprep.subr.bf16.mxu0 0
        %1590 = vmatpush1.bf16.msra.mxu0 0
        %1591 = vmatprep.subr.bf16.mxu0 0
        %1592 = vmatpush1.bf16.msra.mxu0 0
        %1593 = vmatprep.subr.bf16.mxu0 0
        %1594 = vmatpush1.bf16.msra.mxu0 0
        %1595 = vmatprep.subr.bf16.mxu0 0
        %1596 = vmatpush1.bf16.msra.mxu0 0
        %1597 = vmatprep.subr.bf16.mxu0 0
        %1598 = vmatpush1.bf16.msra.mxu0 0
        %1599 = vmatprep.subr.bf16.mxu0 0
        %1600 = vmatpush1.bf16.msra.mxu0 0
        %1601 = vmatprep.subr.bf16.mxu0 0
        %1602 = vmatpush1.bf16.msra.mxu0 0
        %1603 = vmatprep.subr.bf16.mxu0 0
        %1604 = vmatpush1.bf16.msra.mxu0 0
        %1605 = vmatprep.subr.bf16.mxu0 0
        %1606 = vmatpush1.bf16.msra.mxu0 0
        %1607 = vmatprep.subr.bf16.mxu0 0
        %1608 = vmatpush1.bf16.msra.mxu0 0
        %1609 = vmatprep.subr.bf16.mxu0 0
        %1610 = vmatpush1.bf16.msra.mxu0 0
        %1611 = vmatprep.subr.bf16.mxu0 0
        %1612 = vmatpush1.bf16.msra.mxu0 0
        %1613 = vmatprep.subr.bf16.mxu0 0
        %1614 = vmatpush1.bf16.msra.mxu0 0
        %1615 = vmatprep.subr.bf16.mxu0 0
        %1616 = vmatpush1.bf16.msra.mxu0 0
        %1617 = vmatprep.mubr.bf16.mxu0 0
        %1618 = vmatmul.mubr.bf16.gmra.mrb[0].mxu0 %v1583
        %v1619 = vpop.f32.mrb[0].mxu0
        %v1620 = vadd.f32 0.0, %v1619
        %v1621 = vpop.f32.mrb[0].mxu0
        %v1622 = vpop.f32.mrb[0].mxu0
        %v1623 = vadd.f32 0.0, %v1622
        %v1624 = vpop.f32.mrb[0].mxu0
        %1625 = vdwg.mxu0
        %v1626 = vpack.c.bf16 %v1491, %v1488
        %v1627 = vpack.c.bf16 %v1535, %v1532
        %v1628 = vpack.c.bf16 %v1579, %v1576
        %v1629 = vpack.c.bf16 %v1623, %v1620
        %v1630 = vld [vmem:[%s651] sm:$0xf]
        %v1631 = vld [vmem:[%s651 + $0x4] sm:$0xf]
        %v1632 = vld [vmem:[%s651 + $0x8] sm:$0xf]
        %v1633 = vld [vmem:[%s651 + $0xc] sm:$0xf]
        %v1634 = vld [vmem:[%s651 + $0x10] sm:$0xf]
        %v1635 = vld [vmem:[%s651 + $0x14] sm:$0xf]
        %v1636 = vld [vmem:[%s651 + $0x18] sm:$0xf]
        %v1637 = vld [vmem:[%s651 + $0x1c] sm:$0xf]
        %v1638 = vld [vmem:[%s651 + $0x20] sm:$0xf]
        %v1639 = vld [vmem:[%s651 + $0x24] sm:$0xf]
        %v1640 = vld [vmem:[%s651 + $0x28] sm:$0xf]
        %v1641 = vld [vmem:[%s651 + $0x2c] sm:$0xf]
        %v1642 = vld [vmem:[%s651 + $0x30] sm:$0xf]
        %v1643 = vld [vmem:[%s651 + $0x34] sm:$0xf]
        %v1644 = vld [vmem:[%s651 + $0x38] sm:$0xf]
        %v1645 = vld [vmem:[%s651 + $0x3c] sm:$0xf]
        %v1650 = vunpack.c.l.b16 %v1630
        %v1651 = vunpack.c.l.b16 %v1631
        %v1652 = vunpack.c.l.b16 %v1632
        %v1653 = vunpack.c.l.b16 %v1633
        %v1654 = vpack.c.b16 %v1651, %v1650
        %v1655 = vpack.c.b16 %v1653, %v1652
        %v1659 = vsel %vm1164, %v1626, 0
        %1661 = vmatprep.subr.bf16.mxu0 0
        %1662 = vmatpush1.bf16.msra.mxu0 %v1654
        %1663 = vmatprep.subr.bf16.mxu0 0
        %1664 = vmatpush1.bf16.msra.mxu0 %v1655
        %1665 = vmatprep.subr.bf16.mxu0 0
        %1666 = vmatpush1.bf16.msra.mxu0 0
        %1667 = vmatprep.subr.bf16.mxu0 0
        %1668 = vmatpush1.bf16.msra.mxu0 0
        %1669 = vmatprep.subr.bf16.mxu0 0
        %1670 = vmatpush1.bf16.msra.mxu0 0
        %1671 = vmatprep.subr.bf16.mxu0 0
        %1672 = vmatpush1.bf16.msra.mxu0 0
        %1673 = vmatprep.subr.bf16.mxu0 0
        %1674 = vmatpush1.bf16.msra.mxu0 0
        %1675 = vmatprep.subr.bf16.mxu0 0
        %1676 = vmatpush1.bf16.msra.mxu0 0
        %1677 = vmatprep.subr.bf16.mxu0 0
        %1678 = vmatpush1.bf16.msra.mxu0 0
        %1679 = vmatprep.subr.bf16.mxu0 0
        %1680 = vmatpush1.bf16.msra.mxu0 0
        %1681 = vmatprep.subr.bf16.mxu0 0
        %1682 = vmatpush1.bf16.msra.mxu0 0
        %1683 = vmatprep.subr.bf16.mxu0 0
        %1684 = vmatpush1.bf16.msra.mxu0 0
        %1685 = vmatprep.subr.bf16.mxu0 0
        %1686 = vmatpush1.bf16.msra.mxu0 0
        %1687 = vmatprep.subr.bf16.mxu0 0
        %1688 = vmatpush1.bf16.msra.mxu0 0
        %1689 = vmatprep.subr.bf16.mxu0 0
        %1690 = vmatpush1.bf16.msra.mxu0 0
        %1691 = vmatprep.subr.bf16.mxu0 0
        %1692 = vmatpush1.bf16.msra.mxu0 0
        %1693 = vmatprep.mubr.bf16.mxu0 0
        %1694 = vmatmul.mubr.bf16.gmra.mrb[0].mxu0 %v1659
        %v1695 = vpop.f32.mrb[0].mxu0
        %v1696 = vadd.f32 0.0, %v1695
        %v1697 = vpop.f32.mrb[0].mxu0
        %v1698 = vpop.f32.mrb[0].mxu0
        %v1699 = vadd.f32 0.0, %v1698
        %v1700 = vpop.f32.mrb[0].mxu0
        %1701 = vdwg.mxu0
        %v1706 = vunpack.c.l.b16 %v1634
        %v1707 = vunpack.c.l.b16 %v1635
        %v1708 = vunpack.c.l.b16 %v1636
        %v1709 = vunpack.c.l.b16 %v1637
        %v1710 = vpack.c.b16 %v1707, %v1706
        %v1711 = vpack.c.b16 %v1709, %v1708
        %v1715 = vsel %vm1164, %v1627, 0
        %1717 = vmatprep.subr.bf16.mxu0 0
        %1718 = vmatpush1.bf16.msra.mxu0 %v1710
        %1719 = vmatprep.subr.bf16.mxu0 0
        %1720 = vmatpush1.bf16.msra.mxu0 %v1711
        %1721 = vmatprep.subr.bf16.mxu0 0
        %1722 = vmatpush1.bf16.msra.mxu0 0
        %1723 = vmatprep.subr.bf16.mxu0 0
        %1724 = vmatpush1.bf16.msra.mxu0 0
        %1725 = vmatprep.subr.bf16.mxu0 0
        %1726 = vmatpush1.bf16.msra.mxu0 0
        %1727 = vmatprep.subr.bf16.mxu0 0
        %1728 = vmatpush1.bf16.msra.mxu0 0
        %1729 = vmatprep.subr.bf16.mxu0 0
        %1730 = vmatpush1.bf16.msra.mxu0 0
        %1731 = vmatprep.subr.bf16.mxu0 0
        %1732 = vmatpush1.bf16.msra.mxu0 0
        %1733 = vmatprep.subr.bf16.mxu0 0
        %1734 = vmatpush1.bf16.msra.mxu0 0
        %1735 = vmatprep.subr.bf16.mxu0 0
        %1736 = vmatpush1.bf16.msra.mxu0 0
        %1737 = vmatprep.subr.bf16.mxu0 0
        %1738 = vmatpush1.bf16.msra.mxu0 0
        %1739 = vmatprep.subr.bf16.mxu0 0
        %1740 = vmatpush1.bf16.msra.mxu0 0
        %1741 = vmatprep.subr.bf16.mxu0 0
        %1742 = vmatpush1.bf16.msra.mxu0 0
        %1743 = vmatprep.subr.bf16.mxu0 0
        %1744 = vmatpush1.bf16.msra.mxu0 0
        %1745 = vmatprep.subr.bf16.mxu0 0
        %1746 = vmatpush1.bf16.msra.mxu0 0
        %1747 = vmatprep.subr.bf16.mxu0 0
        %1748 = vmatpush1.bf16.msra.mxu0 0
        %1749 = vmatprep.mubr.bf16.mxu0 0
        %1750 = vmatmul.mubr.bf16.gmra.mrb[0].mxu0 %v1715
        %v1751 = vpop.f32.mrb[0].mxu0
        %v1752 = vadd.f32 0.0, %v1751
        %v1753 = vpop.f32.mrb[0].mxu0
        %v1754 = vpop.f32.mrb[0].mxu0
        %v1755 = vadd.f32 0.0, %v1754
        %v1756 = vpop.f32.mrb[0].mxu0
        %1757 = vdwg.mxu0
        %v1762 = vunpack.c.l.b16 %v1638
        %v1763 = vunpack.c.l.b16 %v1639
        %v1764 = vunpack.c.l.b16 %v1640
        %v1765 = vunpack.c.l.b16 %v1641
        %v1766 = vpack.c.b16 %v1763, %v1762
        %v1767 = vpack.c.b16 %v1765, %v1764
        %v1771 = vsel %vm1164, %v1628, 0
        %1773 = vmatprep.subr.bf16.mxu0 0
        %1774 = vmatpush1.bf16.msra.mxu0 %v1766
        %1775 = vmatprep.subr.bf16.mxu0 0
        %1776 = vmatpush1.bf16.msra.mxu0 %v1767
        %1777 = vmatprep.subr.bf16.mxu0 0
        %1778 = vmatpush1.bf16.msra.mxu0 0
        %1779 = vmatprep.subr.bf16.mxu0 0
        %1780 = vmatpush1.bf16.msra.mxu0 0
        %1781 = vmatprep.subr.bf16.mxu0 0
        %1782 = vmatpush1.bf16.msra.mxu0 0
        %1783 = vmatprep.subr.bf16.mxu0 0
        %1784 = vmatpush1.bf16.msra.mxu0 0
        %1785 = vmatprep.subr.bf16.mxu0 0
        %1786 = vmatpush1.bf16.msra.mxu0 0
        %1787 = vmatprep.subr.bf16.mxu0 0
        %1788 = vmatpush1.bf16.msra.mxu0 0
        %1789 = vmatprep.subr.bf16.mxu0 0
        %1790 = vmatpush1.bf16.msra.mxu0 0
        %1791 = vmatprep.subr.bf16.mxu0 0
        %1792 = vmatpush1.bf16.msra.mxu0 0
        %1793 = vmatprep.subr.bf16.mxu0 0
        %1794 = vmatpush1.bf16.msra.mxu0 0
        %1795 = vmatprep.subr.bf16.mxu0 0
        %1796 = vmatpush1.bf16.msra.mxu0 0
        %1797 = vmatprep.subr.bf16.mxu0 0
        %1798 = vmatpush1.bf16.msra.mxu0 0
        %1799 = vmatprep.subr.bf16.mxu0 0
        %1800 = vmatpush1.bf16.msra.mxu0 0
        %1801 = vmatprep.subr.bf16.mxu0 0
        %1802 = vmatpush1.bf16.msra.mxu0 0
        %1803 = vmatprep.subr.bf16.mxu0 0
        %1804 = vmatpush1.bf16.msra.mxu0 0
        %1805 = vmatprep.mubr.bf16.mxu0 0
        %1806 = vmatmul.mubr.bf16.gmra.mrb[0].mxu0 %v1771
        %v1807 = vpop.f32.mrb[0].mxu0
        %v1808 = vadd.f32 0.0, %v1807
        %v1809 = vpop.f32.mrb[0].mxu0
        %v1810 = vpop.f32.mrb[0].mxu0
        %v1811 = vadd.f32 0.0, %v1810
        %v1812 = vpop.f32.mrb[0].mxu0
        %1813 = vdwg.mxu0
        %v1818 = vunpack.c.l.b16 %v1642
        %v1819 = vunpack.c.l.b16 %v1643
        %v1820 = vunpack.c.l.b16 %v1644
        %v1821 = vunpack.c.l.b16 %v1645
        %v1822 = vpack.c.b16 %v1819, %v1818
        %v1823 = vpack.c.b16 %v1821, %v1820
        %v1827 = vsel %vm1164, %v1629, 0
        %1829 = vmatprep.subr.bf16.mxu0 0
        %1830 = vmatpush1.bf16.msra.mxu0 %v1822
        %1831 = vmatprep.subr.bf16.mxu0 0
        %1832 = vmatpush1.bf16.msra.mxu0 %v1823
        %1833 = vmatprep.subr.bf16.mxu0 0
        %1834 = vmatpush1.bf16.msra.mxu0 0
        %1835 = vmatprep.subr.bf16.mxu0 0
        %1836 = vmatpush1.bf16.msra.mxu0 0
        %1837 = vmatprep.subr.bf16.mxu0 0
        %1838 = vmatpush1.bf16.msra.mxu0 0
        %1839 = vmatprep.subr.bf16.mxu0 0
        %1840 = vmatpush1.bf16.msra.mxu0 0
        %1841 = vmatprep.subr.bf16.mxu0 0
        %1842 = vmatpush1.bf16.msra.mxu0 0
        %1843 = vmatprep.subr.bf16.mxu0 0
        %1844 = vmatpush1.bf16.msra.mxu0 0
        %1845 = vmatprep.subr.bf16.mxu0 0
        %1846 = vmatpush1.bf16.msra.mxu0 0
        %1847 = vmatprep.subr.bf16.mxu0 0
        %1848 = vmatpush1.bf16.msra.mxu0 0
        %1849 = vmatprep.subr.bf16.mxu0 0
        %1850 = vmatpush1.bf16.msra.mxu0 0
        %1851 = vmatprep.subr.bf16.mxu0 0
        %1852 = vmatpush1.bf16.msra.mxu0 0
        %1853 = vmatprep.subr.bf16.mxu0 0
        %1854 = vmatpush1.bf16.msra.mxu0 0
        %1855 = vmatprep.subr.bf16.mxu0 0
        %1856 = vmatpush1.bf16.msra.mxu0 0
        %1857 = vmatprep.subr.bf16.mxu0 0
        %1858 = vmatpush1.bf16.msra.mxu0 0
        %1859 = vmatprep.subr.bf16.mxu0 0
        %1860 = vmatpush1.bf16.msra.mxu0 0
        %1861 = vmatprep.mubr.bf16.mxu0 0
        %1862 = vmatmul.mubr.bf16.gmra.mrb[0].mxu0 %v1827
        %v1863 = vpop.f32.mrb[0].mxu0
        %v1864 = vadd.f32 0.0, %v1863
        %v1865 = vpop.f32.mrb[0].mxu0
        %v1866 = vpop.f32.mrb[0].mxu0
        %v1867 = vadd.f32 0.0, %v1866
        %v1868 = vpop.f32.mrb[0].mxu0
        %1869 = vdwg.mxu0
        %v1870 = vadd.f32 %v1696, %v1752
        %v1871 = vadd.f32 %v1870, %v1808
        %v1872 = vadd.f32 %v1871, %v1864
        %v1873 = vadd.f32 %v1699, %v1755
        %v1874 = vadd.f32 %v1873, %v1811
        %v1875 = vadd.f32 %v1874, %v1867
        %v1876 = vld [vmem:[%s766] sm:$0x1]
        %v1878 = vlaneseq
        %v1879 = vshrl.u32 %v1878, 7
        %v1880 = vsub.s32 0, %v1879
        %v1881 = vrot.slane %v1876, %v1880
        %v1883 = vadd.f32 %v1872, %v1881
        %v1884 = vadd.f32 %v1875, %v1881
        %v1885 = vadd.f32 %v789, %v1883
        %v1886 = vadd.f32 %v790, %v1884
        %v1887 = vld [vmem:[%s769] sm:$0x1]
        %v1888 = vld [vmem:[%s772] sm:$0x1]
        %1889 = vadd.xlane.f32.xlu0 %v1885
        %v1890 = vpop.xlane.xlu0 %1889
        %1891 = vadd.xlane.f32.xlu0 %v1886
        %v1892 = vpop.xlane.xlu0 %1891
        %v1893 = vmul.f32 %v1890, %v797
        %v1894 = vmul.f32 %v1892, %v797
        %v1895 = vsub.f32 %v1885, %v1893
        %v1896 = vsub.f32 %v1886, %v1894
        %v1897 = vmul.f32 %v1895, %v1895
        %v1898 = vmul.f32 %v1896, %v1896
        %1899 = vadd.xlane.f32.xlu0 %v1897
        %v1900 = vpop.xlane.xlu0 %1899
        %1901 = vadd.xlane.f32.xlu0 %v1898
        %v1902 = vpop.xlane.xlu0 %1901
        %v1903 = vmul.f32 %v1900, %v797
        %v1904 = vmul.f32 %v1902, %v797
        %v1905 = vadd.f32 %v1903, 1e-05
        %v1906 = vadd.f32 %v1904, 1e-05
        %v1907 = vrsqrt.pop %v1905
        %v1908 = vrsqrt.pop %v1906
        %v1909 = vmul.f32 %v1895, %v1907
        %v1910 = vmul.f32 %v1896, %v1908
        %v1912 = vlaneseq
        %v1913 = vshrl.u32 %v1912, 7
        %v1914 = vsub.s32 0, %v1913
        %v1915 = vrot.slane %v1887, %v1914
        %v1917 = vmul.f32 %v1909, %v1915
        %v1918 = vmul.f32 %v1910, %v1915
        %v1920 = vlaneseq
        %v1921 = vshrl.u32 %v1920, 7
        %v1922 = vsub.s32 0, %v1921
        %v1923 = vrot.slane %v1888, %v1922
        %v1925 = vadd.f32 %v1917, %v1923
        %v1926 = vadd.f32 %v1918, %v1923
        %v1927 = vpack.c.bf16 %v1926, %v1925
        %v1928 = vld [vmem:[%s660] sm:$0xff]
        %v1929 = vld [vmem:[%s660 + $0x8] sm:$0xff]
        %v1930 = vld [vmem:[%s660 + $0x10] sm:$0xff]
        %v1931 = vld [vmem:[%s660 + $0x18] sm:$0xff]
        %v1932 = vld [vmem:[%s660 + $0x20] sm:$0xff]
        %v1933 = vld [vmem:[%s660 + $0x28] sm:$0xff]
        %v1934 = vld [vmem:[%s660 + $0x30] sm:$0xff]
        %v1935 = vld [vmem:[%s660 + $0x38] sm:$0xff]
        %v1936 = vld [vmem:[%s660 + $0x40] sm:$0xff]
        %v1937 = vld [vmem:[%s660 + $0x48] sm:$0xff]
        %v1938 = vld [vmem:[%s660 + $0x50] sm:$0xff]
        %v1939 = vld [vmem:[%s660 + $0x58] sm:$0xff]
        %v1940 = vld [vmem:[%s660 + $0x60] sm:$0xff]
        %v1941 = vld [vmem:[%s660 + $0x68] sm:$0xff]
        %v1942 = vld [vmem:[%s660 + $0x70] sm:$0xff]
        %v1943 = vld [vmem:[%s660 + $0x78] sm:$0xff]
        %v1944 = vld [vmem:[%s660 + $0x80] sm:$0xff]
        %v1945 = vld [vmem:[%s660 + $0x88] sm:$0xff]
        %v1946 = vld [vmem:[%s660 + $0x90] sm:$0xff]
        %v1947 = vld [vmem:[%s660 + $0x98] sm:$0xff]
        %v1948 = vld [vmem:[%s660 + $0xa0] sm:$0xff]
        %v1949 = vld [vmem:[%s660 + $0xa8] sm:$0xff]
        %v1950 = vld [vmem:[%s660 + $0xb0] sm:$0xff]
        %v1951 = vld [vmem:[%s660 + $0xb8] sm:$0xff]
        %v1952 = vld [vmem:[%s660 + $0xc0] sm:$0xff]
        %v1953 = vld [vmem:[%s660 + $0xc8] sm:$0xff]
        %v1954 = vld [vmem:[%s660 + $0xd0] sm:$0xff]
        %v1955 = vld [vmem:[%s660 + $0xd8] sm:$0xff]
        %v1956 = vld [vmem:[%s660 + $0xe0] sm:$0xff]
        %v1957 = vld [vmem:[%s660 + $0xe8] sm:$0xff]
        %v1958 = vld [vmem:[%s660 + $0xf0] sm:$0xff]
        %v1959 = vld [vmem:[%s660 + $0xf8] sm:$0xff]
        %v1960 = vld [vmem:[%s776] sm:$0xf]
        %v1962 = vlaneseq
        %v1963 = vshrl.u32 %v1962, 7
        %v1964 = vsub.s32 0, %v1963
        %v1965 = vrot.slane %v1960, %v1964
        %v1966 = vlaneseq
        %v1967 = vshrl.u32 %v1966, 7
        %v1968 = vsub.s32 1, %v1967
        %v1969 = vrot.slane %v1960, %v1968
        %v1970 = vlaneseq
        %v1971 = vshrl.u32 %v1970, 7
        %v1972 = vsub.s32 2, %v1971
        %v1973 = vrot.slane %v1960, %v1972
        %v1974 = vlaneseq
        %v1975 = vshrl.u32 %v1974, 7
        %v1976 = vsub.s32 3, %v1975
        %v1977 = vrot.slane %v1960, %v1976
        %v2014 = vunpack.c.l.b16 %v1928
        %v2015 = vunpack.c.h.b16 %v1928
        %v2016 = vunpack.c.l.b16 %v1929
        %v2017 = vunpack.c.h.b16 %v1929
        %v2018 = vunpack.c.l.b16 %v1930
        %v2019 = vunpack.c.h.b16 %v1930
        %v2020 = vunpack.c.l.b16 %v1931
        %v2021 = vunpack.c.h.b16 %v1931
        %v2022 = vunpack.c.l.b16 %v1932
        %v2023 = vunpack.c.h.b16 %v1932
        %v2024 = vunpack.c.l.b16 %v1933
        %v2025 = vunpack.c.h.b16 %v1933
        %v2026 = vunpack.c.l.b16 %v1934
        %v2027 = vunpack.c.h.b16 %v1934
        %v2028 = vunpack.c.l.b16 %v1935
        %v2029 = vunpack.c.h.b16 %v1935
        %v2030 = vunpack.c.l.b16 %v1936
        %v2031 = vunpack.c.h.b16 %v1936
        %v2032 = vunpack.c.l.b16 %v1937
        %v2033 = vunpack.c.h.b16 %v1937
        %v2034 = vunpack.c.l.b16 %v1938
        %v2035 = vunpack.c.h.b16 %v1938
        %v2036 = vunpack.c.l.b16 %v1939
        %v2037 = vunpack.c.h.b16 %v1939
        %v2038 = vunpack.c.l.b16 %v1940
        %v2039 = vunpack.c.h.b16 %v1940
        %v2040 = vunpack.c.l.b16 %v1941
        %v2041 = vunpack.c.h.b16 %v1941
        %v2042 = vunpack.c.l.b16 %v1942
        %v2043 = vunpack.c.h.b16 %v1942
        %v2044 = vunpack.c.l.b16 %v1943
        %v2045 = vunpack.c.h.b16 %v1943
        %v2046 = vunpack.c.l.b16 %v1944
        %v2047 = vunpack.c.h.b16 %v1944
        %v2048 = vunpack.c.l.b16 %v1945
        %v2049 = vunpack.c.h.b16 %v1945
        %v2050 = vunpack.c.l.b16 %v1946
        %v2051 = vunpack.c.h.b16 %v1946
        %v2052 = vunpack.c.l.b16 %v1947
        %v2053 = vunpack.c.h.b16 %v1947
        %v2054 = vunpack.c.l.b16 %v1948
        %v2055 = vunpack.c.h.b16 %v1948
        %v2056 = vunpack.c.l.b16 %v1949
        %v2057 = vunpack.c.h.b16 %v1949
        %v2058 = vunpack.c.l.b16 %v1950
        %v2059 = vunpack.c.h.b16 %v1950
        %v2060 = vunpack.c.l.b16 %v1951
        %v2061 = vunpack.c.h.b16 %v1951
        %v2062 = vunpack.c.l.b16 %v1952
        %v2063 = vunpack.c.h.b16 %v1952
        %v2064 = vunpack.c.l.b16 %v1953
        %v2065 = vunpack.c.h.b16 %v1953
        %v2066 = vunpack.c.l.b16 %v1954
        %v2067 = vunpack.c.h.b16 %v1954
        %v2068 = vunpack.c.l.b16 %v1955
        %v2069 = vunpack.c.h.b16 %v1955
        %v2070 = vunpack.c.l.b16 %v1956
        %v2071 = vunpack.c.h.b16 %v1956
        %v2072 = vunpack.c.l.b16 %v1957
        %v2073 = vunpack.c.h.b16 %v1957
        %v2074 = vunpack.c.l.b16 %v1958
        %v2075 = vunpack.c.h.b16 %v1958
        %v2076 = vunpack.c.l.b16 %v1959
        %v2077 = vunpack.c.h.b16 %v1959
        %v2078 = vpack.c.b16 %v2018, %v2014
        %v2079 = vpack.c.b16 %v2019, %v2015
        %v2080 = vpack.c.b16 %v2020, %v2016
        %v2081 = vpack.c.b16 %v2021, %v2017
        %v2082 = vpack.c.b16 %v2026, %v2022
        %v2083 = vpack.c.b16 %v2027, %v2023
        %v2084 = vpack.c.b16 %v2028, %v2024
        %v2085 = vpack.c.b16 %v2029, %v2025
        %v2086 = vpack.c.b16 %v2034, %v2030
        %v2087 = vpack.c.b16 %v2035, %v2031
        %v2088 = vpack.c.b16 %v2036, %v2032
        %v2089 = vpack.c.b16 %v2037, %v2033
        %v2090 = vpack.c.b16 %v2042, %v2038
        %v2091 = vpack.c.b16 %v2043, %v2039
        %v2092 = vpack.c.b16 %v2044, %v2040
        %v2093 = vpack.c.b16 %v2045, %v2041
        %v2094 = vpack.c.b16 %v2050, %v2046
        %v2095 = vpack.c.b16 %v2051, %v2047
        %v2096 = vpack.c.b16 %v2052, %v2048
        %v2097 = vpack.c.b16 %v2053, %v2049
        %v2098 = vpack.c.b16 %v2058, %v2054
        %v2099 = vpack.c.b16 %v2059, %v2055
        %v2100 = vpack.c.b16 %v2060, %v2056
        %v2101 = vpack.c.b16 %v2061, %v2057
        %v2102 = vpack.c.b16 %v2066, %v2062
        %v2103 = vpack.c.b16 %v2067, %v2063
        %v2104 = vpack.c.b16 %v2068, %v2064
        %v2105 = vpack.c.b16 %v2069, %v2065
        %v2106 = vpack.c.b16 %v2074, %v2070
        %v2107 = vpack.c.b16 %v2075, %v2071
        %v2108 = vpack.c.b16 %v2076, %v2072
        %v2109 = vpack.c.b16 %v2077, %v2073
        %2142 = vmatprep.subr.bf16.mxu0 %v2079
        %2143 = vmatpush1.bf16.msra.mxu0 %v2078
        %2144 = vmatprep.subr.bf16.mxu0 %v2083
        %2145 = vmatpush1.bf16.msra.mxu0 %v2082
        %2146 = vmatprep.subr.bf16.mxu0 %v2087
        %2147 = vmatpush1.bf16.msra.mxu0 %v2086
        %2148 = vmatprep.subr.bf16.mxu0 %v2091
        %2149 = vmatpush1.bf16.msra.mxu0 %v2090
        %2150 = vmatprep.subr.bf16.mxu0 %v2095
        %2151 = vmatpush1.bf16.msra.mxu0 %v2094
        %2152 = vmatprep.subr.bf16.mxu0 %v2099
        %2153 = vmatpush1.bf16.msra.mxu0 %v2098
        %2154 = vmatprep.subr.bf16.mxu0 %v2103
        %2155 = vmatpush1.bf16.msra.mxu0 %v2102
        %2156 = vmatprep.subr.bf16.mxu0 %v2107
        %2157 = vmatpush1.bf16.msra.mxu0 %v2106
        %2158 = vmatprep.subr.bf16.mxu0 0
        %2159 = vmatpush1.bf16.msra.mxu0 0
        %2160 = vmatprep.subr.bf16.mxu0 0
        %2161 = vmatpush1.bf16.msra.mxu0 0
        %2162 = vmatprep.subr.bf16.mxu0 0
        %2163 = vmatpush1.bf16.msra.mxu0 0
        %2164 = vmatprep.subr.bf16.mxu0 0
        %2165 = vmatpush1.bf16.msra.mxu0 0
        %2166 = vmatprep.subr.bf16.mxu0 0
        %2167 = vmatpush1.bf16.msra.mxu0 0
        %2168 = vmatprep.subr.bf16.mxu0 0
        %2169 = vmatpush1.bf16.msra.mxu0 0
        %2170 = vmatprep.subr.bf16.mxu0 0
        %2171 = vmatpush1.bf16.msra.mxu0 0
        %2172 = vmatprep.subr.bf16.mxu0 0
        %2173 = vmatpush1.bf16.msra.mxu0 0
        %2174 = vmatprep.mubr.bf16.mxu0 0
        %2175 = vmatmul.mubr.bf16.gmra.mrb[0].mxu0 %v1927
        %v2176 = vpop.f32.mrb[0].mxu0
        %v2177 = vadd.f32 %v1965, %v2176
        %v2178 = vpop.f32.mrb[0].mxu0
        %v2179 = vadd.f32 %v1969, %v2178
        %v2180 = vpop.f32.mrb[0].mxu0
        %v2181 = vadd.f32 %v1965, %v2180
        %v2182 = vpop.f32.mrb[0].mxu0
        %v2183 = vadd.f32 %v1969, %v2182
        %2184 = vdwg.mxu0
        %2185 = vmatprep.subr.bf16.mxu0 %v2081
        %2186 = vmatpush1.bf16.msra.mxu0 %v2080
        %2187 = vmatprep.subr.bf16.mxu0 %v2085
        %2188 = vmatpush1.bf16.msra.mxu0 %v2084
        %2189 = vmatprep.subr.bf16.mxu0 %v2089
        %2190 = vmatpush1.bf16.msra.mxu0 %v2088
        %2191 = vmatprep.subr.bf16.mxu0 %v2093
        %2192 = vmatpush1.bf16.msra.mxu0 %v2092
        %2193 = vmatprep.subr.bf16.mxu0 %v2097
        %2194 = vmatpush1.bf16.msra.mxu0 %v2096
        %2195 = vmatprep.subr.bf16.mxu0 %v2101
        %2196 = vmatpush1.bf16.msra.mxu0 %v2100
        %2197 = vmatprep.subr.bf16.mxu0 %v2105
        %2198 = vmatpush1.bf16.msra.mxu0 %v2104
        %2199 = vmatprep.subr.bf16.mxu0 %v2109
        %2200 = vmatpush1.bf16.msra.mxu0 %v2108
        %2201 = vmatprep.subr.bf16.mxu0 0
        %2202 = vmatpush1.bf16.msra.mxu0 0
        %2203 = vmatprep.subr.bf16.mxu0 0
        %2204 = vmatpush1.bf16.msra.mxu0 0
        %2205 = vmatprep.subr.bf16.mxu0 0
        %2206 = vmatpush1.bf16.msra.mxu0 0
        %2207 = vmatprep.subr.bf16.mxu0 0
        %2208 = vmatpush1.bf16.msra.mxu0 0
        %2209 = vmatprep.subr.bf16.mxu0 0
        %2210 = vmatpush1.bf16.msra.mxu0 0
        %2211 = vmatprep.subr.bf16.mxu0 0
        %2212 = vmatpush1.bf16.msra.mxu0 0
        %2213 = vmatprep.subr.bf16.mxu0 0
        %2214 = vmatpush1.bf16.msra.mxu0 0
        %2215 = vmatprep.subr.bf16.mxu0 0
        %2216 = vmatpush1.bf16.msra.mxu0 0
        %2217 = vmatprep.mubr.bf16.mxu0 0
        %2218 = vmatmul.mubr.bf16.gmra.mrb[0].mxu0 %v1927
        %v2219 = vpop.f32.mrb[0].mxu0
        %v2220 = vadd.f32 %v1973, %v2219
        %v2221 = vpop.f32.mrb[0].mxu0
        %v2222 = vadd.f32 %v1977, %v2221
        %v2223 = vpop.f32.mrb[0].mxu0
        %v2224 = vadd.f32 %v1973, %v2223
        %v2225 = vpop.f32.mrb[0].mxu0
        %v2226 = vadd.f32 %v1977, %v2225
        %2227 = vdwg.mxu0
        %v2228 = vmul.f32 %v2177, 1.702
        %v2229 = vmul.f32 %v2179, 1.702
        %v2230 = vmul.f32 %v2220, 1.702
        %v2231 = vmul.f32 %v2222, 1.702
        %v2232 = vmul.f32 %v2181, 1.702
        %v2233 = vmul.f32 %v2183, 1.702
        %v2234 = vmul.f32 %v2224, 1.702
        %v2235 = vmul.f32 %v2226, 1.702
        %v2236 = vxor.u32 %v2228, 2147483648
        %v2237 = vxor.u32 %v2229, 2147483648
        %v2238 = vxor.u32 %v2230, 2147483648
        %v2239 = vxor.u32 %v2231, 2147483648
        %v2240 = vxor.u32 %v2232, 2147483648
        %v2241 = vxor.u32 %v2233, 2147483648
        %v2242 = vxor.u32 %v2234, 2147483648
        %v2243 = vxor.u32 %v2235, 2147483648
        %v2244 = vmul.f32 %v2236, 1.442695
        %v2245 = vpow.pop %v2244
        %v2246 = vmul.f32 %v2237, 1.442695
        %v2247 = vpow.pop %v2246
        %v2248 = vmul.f32 %v2238, 1.442695
        %v2249 = vpow.pop %v2248
        %v2250 = vmul.f32 %v2239, 1.442695
        %v2251 = vpow.pop %v2250
        %v2252 = vmul.f32 %v2240, 1.442695
        %v2253 = vpow.pop %v2252
        %v2254 = vmul.f32 %v2241, 1.442695
        %v2255 = vpow.pop %v2254
        %v2256 = vmul.f32 %v2242, 1.442695
        %v2257 = vpow.pop %v2256
        %v2258 = vmul.f32 %v2243, 1.442695
        %v2259 = vpow.pop %v2258
        %v2260 = vadd.f32 %v2245, 1.0
        %v2261 = vadd.f32 %v2247, 1.0
        %v2262 = vadd.f32 %v2249, 1.0
        %v2263 = vadd.f32 %v2251, 1.0
        %v2264 = vadd.f32 %v2253, 1.0
        %v2265 = vadd.f32 %v2255, 1.0
        %v2266 = vadd.f32 %v2257, 1.0
        %v2267 = vadd.f32 %v2259, 1.0
        %v2268 = vrcp.pop %v2260
        %v2269 = vmul.f32 1.0, %v2268
        %v2270 = vrcp.pop %v2261
        %v2271 = vmul.f32 1.0, %v2270
        %v2272 = vrcp.pop %v2262
        %v2273 = vmul.f32 1.0, %v2272
        %v2274 = vrcp.pop %v2263
        %v2275 = vmul.f32 1.0, %v2274
        %v2276 = vrcp.pop %v2264
        %v2277 = vmul.f32 1.0, %v2276
        %v2278 = vrcp.pop %v2265
        %v2279 = vmul.f32 1.0, %v2278
        %v2280 = vrcp.pop %v2266
        %v2281 = vmul.f32 1.0, %v2280
        %v2282 = vrcp.pop %v2267
        %v2283 = vmul.f32 1.0, %v2282
        %v2284 = vmul.f32 %v2177, %v2269
        %v2285 = vmul.f32 %v2179, %v2271
        %v2286 = vmul.f32 %v2220, %v2273
        %v2287 = vmul.f32 %v2222, %v2275
        %v2288 = vmul.f32 %v2181, %v2277
        %v2289 = vmul.f32 %v2183, %v2279
        %v2290 = vmul.f32 %v2224, %v2281
        %v2291 = vmul.f32 %v2226, %v2283
        %v2292 = vpack.c.bf16 %v2288, %v2284
        %v2293 = vpack.c.bf16 %v2289, %v2285
        %v2294 = vpack.c.bf16 %v2290, %v2286
        %v2295 = vpack.c.bf16 %v2291, %v2287
        %v2296 = vld [vmem:[%s669] sm:$0xf]
        %v2297 = vld [vmem:[%s669 + $0x4] sm:$0xf]
        %v2298 = vld [vmem:[%s669 + $0x8] sm:$0xf]
        %v2299 = vld [vmem:[%s669 + $0xc] sm:$0xf]
        %v2300 = vld [vmem:[%s669 + $0x10] sm:$0xf]
        %v2301 = vld [vmem:[%s669 + $0x14] sm:$0xf]
        %v2302 = vld [vmem:[%s669 + $0x18] sm:$0xf]
        %v2303 = vld [vmem:[%s669 + $0x1c] sm:$0xf]
        %v2304 = vld [vmem:[%s669 + $0x20] sm:$0xf]
        %v2305 = vld [vmem:[%s669 + $0x24] sm:$0xf]
        %v2306 = vld [vmem:[%s669 + $0x28] sm:$0xf]
        %v2307 = vld [vmem:[%s669 + $0x2c] sm:$0xf]
        %v2308 = vld [vmem:[%s669 + $0x30] sm:$0xf]
        %v2309 = vld [vmem:[%s669 + $0x34] sm:$0xf]
        %v2310 = vld [vmem:[%s669 + $0x38] sm:$0xf]
        %v2311 = vld [vmem:[%s669 + $0x3c] sm:$0xf]
        %v2312 = vld [vmem:[%s669 + $0x40] sm:$0xf]
        %v2313 = vld [vmem:[%s669 + $0x44] sm:$0xf]
        %v2314 = vld [vmem:[%s669 + $0x48] sm:$0xf]
        %v2315 = vld [vmem:[%s669 + $0x4c] sm:$0xf]
        %v2316 = vld [vmem:[%s669 + $0x50] sm:$0xf]
        %v2317 = vld [vmem:[%s669 + $0x54] sm:$0xf]
        %v2318 = vld [vmem:[%s669 + $0x58] sm:$0xf]
        %v2319 = vld [vmem:[%s669 + $0x5c] sm:$0xf]
        %v2320 = vld [vmem:[%s669 + $0x60] sm:$0xf]
        %v2321 = vld [vmem:[%s669 + $0x64] sm:$0xf]
        %v2322 = vld [vmem:[%s669 + $0x68] sm:$0xf]
        %v2323 = vld [vmem:[%s669 + $0x6c] sm:$0xf]
        %v2324 = vld [vmem:[%s669 + $0x70] sm:$0xf]
        %v2325 = vld [vmem:[%s669 + $0x74] sm:$0xf]
        %v2326 = vld [vmem:[%s669 + $0x78] sm:$0xf]
        %v2327 = vld [vmem:[%s669 + $0x7c] sm:$0xf]
        %v2328 = vld [vmem:[%s669 + $0x80] sm:$0xf]
        %v2329 = vld [vmem:[%s669 + $0x84] sm:$0xf]
        %v2330 = vld [vmem:[%s669 + $0x88] sm:$0xf]
        %v2331 = vld [vmem:[%s669 + $0x8c] sm:$0xf]
        %v2332 = vld [vmem:[%s669 + $0x90] sm:$0xf]
        %v2333 = vld [vmem:[%s669 + $0x94] sm:$0xf]
        %v2334 = vld [vmem:[%s669 + $0x98] sm:$0xf]
        %v2335 = vld [vmem:[%s669 + $0x9c] sm:$0xf]
        %v2336 = vld [vmem:[%s669 + $0xa0] sm:$0xf]
        %v2337 = vld [vmem:[%s669 + $0xa4] sm:$0xf]
        %v2338 = vld [vmem:[%s669 + $0xa8] sm:$0xf]
        %v2339 = vld [vmem:[%s669 + $0xac] sm:$0xf]
        %v2340 = vld [vmem:[%s669 + $0xb0] sm:$0xf]
        %v2341 = vld [vmem:[%s669 + $0xb4] sm:$0xf]
        %v2342 = vld [vmem:[%s669 + $0xb8] sm:$0xf]
        %v2343 = vld [vmem:[%s669 + $0xbc] sm:$0xf]
        %v2344 = vld [vmem:[%s669 + $0xc0] sm:$0xf]
        %v2345 = vld [vmem:[%s669 + $0xc4] sm:$0xf]
        %v2346 = vld [vmem:[%s669 + $0xc8] sm:$0xf]
        %v2347 = vld [vmem:[%s669 + $0xcc] sm:$0xf]
        %v2348 = vld [vmem:[%s669 + $0xd0] sm:$0xf]
        %v2349 = vld [vmem:[%s669 + $0xd4] sm:$0xf]
        %v2350 = vld [vmem:[%s669 + $0xd8] sm:$0xf]
        %v2351 = vld [vmem:[%s669 + $0xdc] sm:$0xf]
        %v2352 = vld [vmem:[%s669 + $0xe0] sm:$0xf]
        %v2353 = vld [vmem:[%s669 + $0xe4] sm:$0xf]
        %v2354 = vld [vmem:[%s669 + $0xe8] sm:$0xf]
        %v2355 = vld [vmem:[%s669 + $0xec] sm:$0xf]
        %v2356 = vld [vmem:[%s669 + $0xf0] sm:$0xf]
        %v2357 = vld [vmem:[%s669 + $0xf4] sm:$0xf]
        %v2358 = vld [vmem:[%s669 + $0xf8] sm:$0xf]
        %v2359 = vld [vmem:[%s669 + $0xfc] sm:$0xf]
        %v2360 = vld [vmem:[%s779] sm:$0x1]
        %v2362 = vlaneseq
        %v2363 = vshrl.u32 %v2362, 7
        %v2364 = vsub.s32 0, %v2363
        %v2365 = vrot.slane %v2360, %v2364
        %v2431 = vunpack.c.l.b16 %v2296
        %v2432 = vunpack.c.l.b16 %v2297
        %v2433 = vunpack.c.l.b16 %v2298
        %v2434 = vunpack.c.l.b16 %v2299
        %v2435 = vunpack.c.l.b16 %v2300
        %v2436 = vunpack.c.l.b16 %v2301
        %v2437 = vunpack.c.l.b16 %v2302
        %v2438 = vunpack.c.l.b16 %v2303
        %v2439 = vunpack.c.l.b16 %v2304
        %v2440 = vunpack.c.l.b16 %v2305
        %v2441 = vunpack.c.l.b16 %v2306
        %v2442 = vunpack.c.l.b16 %v2307
        %v2443 = vunpack.c.l.b16 %v2308
        %v2444 = vunpack.c.l.b16 %v2309
        %v2445 = vunpack.c.l.b16 %v2310
        %v2446 = vunpack.c.l.b16 %v2311
        %v2447 = vunpack.c.l.b16 %v2312
        %v2448 = vunpack.c.l.b16 %v2313
        %v2449 = vunpack.c.l.b16 %v2314
        %v2450 = vunpack.c.l.b16 %v2315
        %v2451 = vunpack.c.l.b16 %v2316
        %v2452 = vunpack.c.l.b16 %v2317
        %v2453 = vunpack.c.l.b16 %v2318
        %v2454 = vunpack.c.l.b16 %v2319
        %v2455 = vunpack.c.l.b16 %v2320
        %v2456 = vunpack.c.l.b16 %v2321
        %v2457 = vunpack.c.l.b16 %v2322
        %v2458 = vunpack.c.l.b16 %v2323
        %v2459 = vunpack.c.l.b16 %v2324
        %v2460 = vunpack.c.l.b16 %v2325
        %v2461 = vunpack.c.l.b16 %v2326
        %v2462 = vunpack.c.l.b16 %v2327
        %v2463 = vunpack.c.l.b16 %v2328
        %v2464 = vunpack.c.l.b16 %v2329
        %v2465 = vunpack.c.l.b16 %v2330
        %v2466 = vunpack.c.l.b16 %v2331
        %v2467 = vunpack.c.l.b16 %v2332
        %v2468 = vunpack.c.l.b16 %v2333
        %v2469 = vunpack.c.l.b16 %v2334
        %v2470 = vunpack.c.l.b16 %v2335
        %v2471 = vunpack.c.l.b16 %v2336
        %v2472 = vunpack.c.l.b16 %v2337
        %v2473 = vunpack.c.l.b16 %v2338
        %v2474 = vunpack.c.l.b16 %v2339
        %v2475 = vunpack.c.l.b16 %v2340
        %v2476 = vunpack.c.l.b16 %v2341
        %v2477 = vunpack.c.l.b16 %v2342
        %v2478 = vunpack.c.l.b16 %v2343
        %v2479 = vunpack.c.l.b16 %v2344
        %v2480 = vunpack.c.l.b16 %v2345
        %v2481 = vunpack.c.l.b16 %v2346
        %v2482 = vunpack.c.l.b16 %v2347
        %v2483 = vunpack.c.l.b16 %v2348
        %v2484 = vunpack.c.l.b16 %v2349
        %v2485 = vunpack.c.l.b16 %v2350
        %v2486 = vunpack.c.l.b16 %v2351
        %v2487 = vunpack.c.l.b16 %v2352
        %v2488 = vunpack.c.l.b16 %v2353
        %v2489 = vunpack.c.l.b16 %v2354
        %v2490 = vunpack.c.l.b16 %v2355
        %v2491 = vunpack.c.l.b16 %v2356
        %v2492 = vunpack.c.l.b16 %v2357
        %v2493 = vunpack.c.l.b16 %v2358
        %v2494 = vunpack.c.l.b16 %v2359
        %v2495 = vpack.c.b16 %v2432, %v2431
        %v2496 = vpack.c.b16 %v2434, %v2433
        %v2497 = vpack.c.b16 %v2436, %v2435
        %v2498 = vpack.c.b16 %v2438, %v2437
        %v2499 = vpack.c.b16 %v2440, %v2439
        %v2500 = vpack.c.b16 %v2442, %v2441
        %v2501 = vpack.c.b16 %v2444, %v2443
        %v2502 = vpack.c.b16 %v2446, %v2445
        %v2503 = vpack.c.b16 %v2448, %v2447
        %v2504 = vpack.c.b16 %v2450, %v2449
        %v2505 = vpack.c.b16 %v2452, %v2451
        %v2506 = vpack.c.b16 %v2454, %v2453
        %v2507 = vpack.c.b16 %v2456, %v2455
        %v2508 = vpack.c.b16 %v2458, %v2457
        %v2509 = vpack.c.b16 %v2460, %v2459
        %v2510 = vpack.c.b16 %v2462, %v2461
        %v2511 = vpack.c.b16 %v2464, %v2463
        %v2512 = vpack.c.b16 %v2466, %v2465
        %v2513 = vpack.c.b16 %v2468, %v2467
        %v2514 = vpack.c.b16 %v2470, %v2469
        %v2515 = vpack.c.b16 %v2472, %v2471
        %v2516 = vpack.c.b16 %v2474, %v2473
        %v2517 = vpack.c.b16 %v2476, %v2475
        %v2518 = vpack.c.b16 %v2478, %v2477
        %v2519 = vpack.c.b16 %v2480, %v2479
        %v2520 = vpack.c.b16 %v2482, %v2481
        %v2521 = vpack.c.b16 %v2484, %v2483
        %v2522 = vpack.c.b16 %v2486, %v2485
        %v2523 = vpack.c.b16 %v2488, %v2487
        %v2524 = vpack.c.b16 %v2490, %v2489
        %v2525 = vpack.c.b16 %v2492, %v2491
        %v2526 = vpack.c.b16 %v2494, %v2493
        %2559 = vmatprep.subr.bf16.mxu0 0
        %2560 = vmatpush1.bf16.msra.mxu0 %v2495
        %2561 = vmatprep.subr.bf16.mxu0 0
        %2562 = vmatpush1.bf16.msra.mxu0 %v2496
        %2563 = vmatprep.subr.bf16.mxu0 0
        %2564 = vmatpush1.bf16.msra.mxu0 %v2497
        %2565 = vmatprep.subr.bf16.mxu0 0
        %2566 = vmatpush1.bf16.msra.mxu0 %v2498
        %2567 = vmatprep.subr.bf16.mxu0 0
        %2568 = vmatpush1.bf16.msra.mxu0 %v2499
        %2569 = vmatprep.subr.bf16.mxu0 0
        %2570 = vmatpush1.bf16.msra.mxu0 %v2500
        %2571 = vmatprep.subr.bf16.mxu0 0
        %2572 = vmatpush1.bf16.msra.mxu0 %v2501
        %2573 = vmatprep.subr.bf16.mxu0 0
        %2574 = vmatpush1.bf16.msra.mxu0 %v2502
        %2575 = vmatprep.subr.bf16.mxu0 0
        %2576 = vmatpush1.bf16.msra.mxu0 %v2503
        %2577 = vmatprep.subr.bf16.mxu0 0
        %2578 = vmatpush1.bf16.msra.mxu0 %v2504
        %2579 = vmatprep.subr.bf16.mxu0 0
        %2580 = vmatpush1.bf16.msra.mxu0 %v2505
        %2581 = vmatprep.subr.bf16.mxu0 0
        %2582 = vmatpush1.bf16.msra.mxu0 %v2506
        %2583 = vmatprep.subr.bf16.mxu0 0
        %2584 = vmatpush1.bf16.msra.mxu0 %v2507
        %2585 = vmatprep.subr.bf16.mxu0 0
        %2586 = vmatpush1.bf16.msra.mxu0 %v2508
        %2587 = vmatprep.subr.bf16.mxu0 0
        %2588 = vmatpush1.bf16.msra.mxu0 %v2509
        %2589 = vmatprep.subr.bf16.mxu0 0
        %2590 = vmatpush1.bf16.msra.mxu0 %v2510
        %2591 = vmatprep.mubr.bf16.mxu0 %v2293
        %2592 = vmatmul.mubr.bf16.gmra.mrb[0].mxu0 %v2292
        %v2593 = vpop.f32.mrb[0].mxu0
        %v2594 = vadd.f32 %v2365, %v2593
        %v2595 = vpop.f32.mrb[0].mxu0
        %v2596 = vpop.f32.mrb[0].mxu0
        %v2597 = vadd.f32 %v2365, %v2596
        %v2598 = vpop.f32.mrb[0].mxu0
        %2599 = vdwg.mxu0
        %2600 = vmatprep.subr.bf16.mxu0 0
        %2601 = vmatpush1.bf16.msra.mxu0 %v2511
        %2602 = vmatprep.subr.bf16.mxu0 0
        %2603 = vmatpush1.bf16.msra.mxu0 %v2512
        %2604 = vmatprep.subr.bf16.mxu0 0
        %2605 = vmatpush1.bf16.msra.mxu0 %v2513
        %2606 = vmatprep.subr.bf16.mxu0 0
        %2607 = vmatpush1.bf16.msra.mxu0 %v2514
        %2608 = vmatprep.subr.bf16.mxu0 0
        %2609 = vmatpush1.bf16.msra.mxu0 %v2515
        %2610 = vmatprep.subr.bf16.mxu0 0
        %2611 = vmatpush1.bf16.msra.mxu0 %v2516
        %2612 = vmatprep.subr.bf16.mxu0 0
        %2613 = vmatpush1.bf16.msra.mxu0 %v2517
        %2614 = vmatprep.subr.bf16.mxu0 0
        %2615 = vmatpush1.bf16.msra.mxu0 %v2518
        %2616 = vmatprep.subr.bf16.mxu0 0
        %2617 = vmatpush1.bf16.msra.mxu0 %v2519
        %2618 = vmatprep.subr.bf16.mxu0 0
        %2619 = vmatpush1.bf16.msra.mxu0 %v2520
        %2620 = vmatprep.subr.bf16.mxu0 0
        %2621 = vmatpush1.bf16.msra.mxu0 %v2521
        %2622 = vmatprep.subr.bf16.mxu0 0
        %2623 = vmatpush1.bf16.msra.mxu0 %v2522
        %2624 = vmatprep.subr.bf16.mxu0 0
        %2625 = vmatpush1.bf16.msra.mxu0 %v2523
        %2626 = vmatprep.subr.bf16.mxu0 0
        %2627 = vmatpush1.bf16.msra.mxu0 %v2524
        %2628 = vmatprep.subr.bf16.mxu0 0
        %2629 = vmatpush1.bf16.msra.mxu0 %v2525
        %2630 = vmatprep.subr.bf16.mxu0 0
        %2631 = vmatpush1.bf16.msra.mxu0 %v2526
        %2632 = vmatprep.mubr.bf16.mxu0 %v2295
        %2633 = vmatmul.mubr.bf16.gmra.mrb[0].mxu0 %v2294
        %v2634 = vpop.f32.mrb[0].mxu0
        %v2635 = vadd.f32 %v2594, %v2634
        %v2636 = vpop.f32.mrb[0].mxu0
        %v2637 = vpop.f32.mrb[0].mxu0
        %v2638 = vadd.f32 %v2597, %v2637
        %v2639 = vpop.f32.mrb[0].mxu0
        %2640 = vdwg.mxu0
        %v2641 = vadd.f32 %v1885, %v2635
        %v2642 = vadd.f32 %v1886, %v2638
        %2643 = vst [vmem:[#allocation2] sm:$0xff] %v2641
        %2644 = vst [vmem:[#allocation2 + $0x8] sm:$0xff] %v2642
        %p2645 = scmp.eq.s32.totalorder %s44, 1
        // Predicated region
        $region105: #{tpu_custom_call.1} parent=71 // pred_check
          %p2646 = pneg %p2645
        $region106: #{tpu_custom_call.1} parent=71 // pred_check_branch
          %2648 = sbr.rel (%p2646) target = $region108
        $region107: #{tpu_custom_call.1} parent=71 // pred_region
          %2649 = vst [vmem:[%s759] sm:$0xff] %v2641
          %2650 = vst [vmem:[%s759 + $0x8] sm:$0xff] %v2642
        $region108: #{tpu_custom_call.1} parent=71 // pred_fallthru
          _
        %s2651 = sand.u32 %s397, 1
        %s2652 = scalar_lea.sflag [#allocation5], %s2651
        %s2653 = sand.u32 %s397, 1
        %s2654 = smul.addr %s2653, 16
        %s2655 = scalar_lea.vmem [#allocation15], %s2654
        // Predicated region
        $region109: #{tpu_custom_call.1} parent=71 // pred_check
          %p2656 = pneg %p407
        $region110: #{tpu_custom_call.1} parent=71 // pred_check_branch
          %2658 = sbr.rel (%p2656) target = $region112
        $region111: #{tpu_custom_call.1} parent=71 // pred_region
          %s2660 = ssub.s32 256, 256
          %2661 = vsyncadd %s2652, %s2660
          %s2662 = smul.addr %s43, 2
          %s2663 = smul.addr %s2662, 128
          %s2664 = scalar_lea.hbm %s13, %s2663
          %s2665 = sshll.u32 %s2655, 4
          %s2666 = int_to_ptr.vmem [resolvable:$true] %s2665
          %2671 = dma.vmem_to_hbm [thread:$0]  %s2666, 256, %s2664, %s2652, 128, 128, 8
        $region112: #{tpu_custom_call.1} parent=71 // pred_fallthru
          _
      $region72: #{tpu_custom_call.1} parent=5 // pred_fallthru
        _
      %p2672 = scmp.le.s32.totalorder 2, %s34
      // Predicated region
      $region113: #{tpu_custom_call.1} parent=5 // pred_check
        %p2673 = pneg %p2672
      $region114: #{tpu_custom_call.1} parent=5 // pred_check_branch
        %2675 = sbr.rel (%p2673) target = $region116
      $region115: #{tpu_custom_call.1} parent=5 // pred_region
        %s2676 = ssub.s32 %s34, 2
        // Predicated region
        $region117: #{tpu_custom_call.1} parent=115 // pred_check
          %p2677 = pneg %p413
        $region118: #{tpu_custom_call.1} parent=115 // pred_check_branch
          %2679 = sbr.rel (%p2677) target = $region120
        $region119: #{tpu_custom_call.1} parent=115 // pred_region
          %s2680 = sand.u32 %s398, 1
          %s2681 = scalar_lea.sflag [#allocation5], %s2680
          %s2682 = sand.u32 %s398, 1
          %s2683 = smul.addr %s2682, 16
          %s2684 = scalar_lea.vmem [#allocation15], %s2683
          %2685 = dma.done %s2681, 256
        $region120: #{tpu_custom_call.1} parent=115 // pred_fallthru
          _
      $region116: #{tpu_custom_call.1} parent=5 // pred_fallthru
        _
    $region6: #{tpu_custom_call.1} parent=1 // loop_footer
      %s38 = sadd.s32 1, %s34
    $region7: #{tpu_custom_call.1} parent=1 // loop_footer_branch
      %33 = sbr.rel target = $region3
    $region8: #{tpu_custom_call.1} parent=1 // loop_exit
      _
    %2686 = vsyncpa [#allocation4], 1
    %s2687 = scalar_lea.sflag [#allocation4], 1
    %2688 = vsyncpa %s2687, 1
    %2689 = vsyncpa [#allocation7], 1
    %s2690 = scalar_lea.sflag [#allocation7], 1
    %2691 = vsyncpa %s2690, 1
    %2692 = vsyncpa [#allocation10], 1
    %s2693 = scalar_lea.sflag [#allocation10], 1
    %2694 = vsyncpa %s2693, 1
    %2695 = vsyncpa [#allocation13], 1
    %s2696 = scalar_lea.sflag [#allocation13], 1
    %2697 = vsyncpa %s2696, 1
    %2698 = vsyncpa [#allocation5], 1
    %s2699 = scalar_lea.sflag [#allocation5], 1
    %2700 = vsyncpa %s2699, 1

</llo_original>
